<compile_context>
chip_gen: v7x
topology: tpu7x:2x2x1
jax: 0.10.0
libtpu: 0.0.40
codegen_flags: <defaults>
</compile_context>

<pallas_src>
import jax
import jax.numpy as jnp
from jax.experimental import pallas as pl
from jax.experimental.pallas import tpu as pltpu


def reward_head_kernel(h_ref, m_ref, w1_ref, b1_ref, w2t_ref, b2_ref,
                       out_ref, acc_ref, msum_ref):
    """One grid step: accumulate masked sums for a [b_tile, s_tile] tile; finalize on last s.

    h_ref   : [b_tile, s_tile, H]  bf16   hidden-state tile
    m_ref   : [b_tile, 1, s_tile]  bf16   attention-mask tile (0/1)
    w1_ref  : [H, H2]              bf16   resident
    b1_ref  : [1, H2]              f32    resident
    w2t_ref : [1, H2]              f32    resident (second linear weight, transposed)
    b2_ref  : [1, 1]               f32    SMEM scalar
    out_ref : [b_tile, 1]          f32
    acc_ref : [b_tile, 1, H]       f32    VMEM scratch (masked sum accumulator)
    msum_ref: [b_tile, 1, 1]       f32    VMEM scratch (mask count accumulator)
    """
    s = pl.program_id(1)

    @pl.when(s == 0)
    def _init():
        acc_ref[...] = jnp.zeros_like(acc_ref)
        msum_ref[...] = jnp.zeros_like(msum_ref)

    m = m_ref[...]                                    # [b_tile, 1, s_tile] bf16
    h = h_ref[...]                                    # [b_tile, s_tile, H] bf16

    # Masked partial sum over the sequence tile: batched mat-vec on the MXU,
    # accumulated in f32 (mask values are exactly 0/1 in bf16).
    acc_ref[...] += jnp.einsum("bxs,bsh->bxh", m, h,
                               preferred_element_type=jnp.float32)
    # Mask count (exact small integers).
    msum_ref[...] += jnp.sum(m.astype(jnp.float32), axis=-1, keepdims=True)

    @pl.when(s == pl.num_programs(1) - 1)
    def _finalize():
        # Guard all-padding rows (0/0 -> NaN in the torch reference); cheap and common.
        msum = jnp.maximum(msum_ref[:, 0, :], 1.0)          # [b_tile, 1] f32
        inv = pl.reciprocal(msum, approx=True)              # EUP slot
        pooled = acc_ref[:, 0, :] * inv                     # [b_tile, H] f32

        # reward_head: Dropout (identity at eval) -> Linear -> ReLU -> Dropout -> Linear
        z1 = jnp.dot(pooled.astype(w1_ref.dtype), w1_ref[...],
                     preferred_element_type=jnp.float32) + b1_ref[...]   # [b_tile, H2]
        a1 = jnp.maximum(z1, 0.0)                                        # ReLU
        # Second linear (out_features=1): VPU multiply + lane reduce (avoid N=1 MXU matmul).
        z2 = jnp.sum(a1 * w2t_ref[...], axis=-1, keepdims=True) + b2_ref[0, 0]  # [b_tile, 1]
        out_ref[...] = z2.astype(out_ref.dtype)


def reward_model_forward(hidden_states, attention_mask, w1, b1, w2, b2,
                         *, b_tile=8, s_tile=128):
    """Masked mean pooling + 2-layer MLP reward head, tiled over (batch, seq)."""
    B, S, H = hidden_states.shape
    H2 = w1.shape[1]

    if b_tile > B:
        b_tile = B
    # (8,128) tiling constraints (driven by the out block [b_tile,1] and mask block lane dim).
    assert B % b_tile == 0 and (b_tile == B or b_tile % 8 == 0), (B, b_tile)
    if s_tile > S:
        s_tile = S
    assert S % s_tile == 0 and (s_tile == S or s_tile % 128 == 0), (S, s_tile)

    # bf16 for HBM traffic; accumulation stays f32 inside the kernel.
    h_bf16 = hidden_states.astype(jnp.bfloat16)
    m3 = attention_mask.astype(jnp.bfloat16).reshape(B, 1, S)
    w1_bf16 = w1.astype(jnp.bfloat16)
    b1_f32 = b1.astype(jnp.float32).reshape(1, H2)
    w2t_f32 = w2.astype(jnp.float32).reshape(1, H2)     # [H2,1] -> [1,H2] (lane dense)
    b2_f32 = b2.astype(jnp.float32).reshape(1, 1)

    grid = (B // b_tile, S // s_tile)

    grid_spec = pltpu.PrefetchScalarGridSpec(
        num_scalar_prefetch=0,
        grid=grid,
        in_specs=[
            pl.BlockSpec((b_tile, s_tile, H), lambda b, s: (b, s, 0)),   # hidden tile
            pl.BlockSpec((b_tile, 1, s_tile), lambda b, s: (b, 0, s)),   # mask tile
            pl.BlockSpec((H, H2), lambda b, s: (0, 0)),                  # w1 (resident)
            pl.BlockSpec((1, H2), lambda b, s: (0, 0)),                  # b1 (resident)
            pl.BlockSpec((1, H2), lambda b, s: (0, 0)),                  # w2^T (resident)
            pl.BlockSpec(memory_space=pltpu.MemorySpace.SMEM),           # b2 scalar
        ],
        out_specs=pl.BlockSpec((b_tile, 1), lambda b, s: (b, 0)),
        scratch_shapes=[
            pltpu.VMEM((b_tile, 1, H), jnp.float32),   # pooled-sum accumulator
            pltpu.VMEM((b_tile, 1, 1), jnp.float32),   # mask-count accumulator
        ],
    )

    return pl.pallas_call(
        reward_head_kernel,
        out_shape=jax.ShapeDtypeStruct((B, 1), jnp.float32),
        grid_spec=grid_spec,
        compiler_params=pltpu.CompilerParams(
            dimension_semantics=("parallel", "arbitrary"),
            vmem_limit_bytes=32 * 1024 * 1024,
        ),
    )(h_bf16, m3, w1_bf16, b1_f32, w2t_f32, b2_f32)


def reference_forward(hidden_states, attention_mask, w1, b1, w2, b2):
    """Pure-JAX f32 reference (matches the PyTorch module)."""
    masked = hidden_states * attention_mask[:, :, None]
    pooled = masked.sum(axis=1) / attention_mask.sum(axis=1, keepdims=True)
    z1 = jnp.maximum(pooled @ w1 + b1, 0.0)
    return z1 @ w2 + b2


if __name__ == "__main__":
    # Small-but-tileable shapes consistent with the module's forward:
    #   input_ids: [B, S] -> hidden_states: [B, S, H] -> rewards: [B, 1]
    B, S, H = 16, 256, 128
    H2 = H // 2
    VOCAB = 97

    key = jax.random.PRNGKey(0)
    k_emb, k_ids, k_len, k_w1, k_b1, k_w2, k_b2 = jax.random.split(key, 7)

    # --- stub base model: embedding lookup (glue, plain JAX) ---
    embedding = jax.random.normal(k_emb, (VOCAB, H), dtype=jnp.float32) * 0.02
    input_ids = jax.random.randint(k_ids, (B, S), 0, VOCAB)
    hidden_states = embedding[input_ids]                                  # [B, S, H] f32

    # attention mask with padding at the tail (lengths in [S//2, S])
    lengths = jax.random.randint(k_len, (B,), S // 2, S + 1)
    attention_mask = (jnp.arange(S)[None, :] < lengths[:, None]).astype(jnp.float32)

    # --- reward head parameters (deterministic init) ---
    w1 = jax.random.normal(k_w1, (H, H2), dtype=jnp.float32) * 0.02
    b1 = jax.random.normal(k_b1, (1, H2), dtype=jnp.float32) * 0.02
    w2 = jax.random.normal(k_w2, (H2, 1), dtype=jnp.float32) * 0.02
    b2 = jax.random.normal(k_b2, (1, 1), dtype=jnp.float32) * 0.02

    rewards = reward_model_forward(hidden_states, attention_mask, w1, b1, w2, b2,
                                   b_tile=8, s_tile=128)
    rewards = jax.block_until_ready(rewards)

    ref = reference_forward(hidden_states, attention_mask, w1, b1, w2, b2)
    assert rewards.shape == (B, 1), rewards.shape
    # Tolerance accounts for bf16 HBM traffic + approx reciprocal (accumulation is f32).
    assert jnp.allclose(rewards, ref, atol=1e-3, rtol=1e-2), (rewards, ref)

    print("KERNEL_OK")
</pallas_src>

<mosaic_0001>
module attributes {stable_mosaic.version = 11 : i64} {
  func.func @reward_head_kernel(%arg0: i32, %arg1: i32, %arg2: memref<8x128x128xbf16, #tpu.memory_space<vmem>>, %arg3: memref<8x1x128xbf16, #tpu.memory_space<vmem>>, %arg4: memref<128x64xbf16, #tpu.memory_space<vmem>>, %arg5: memref<1x64xf32, #tpu.memory_space<vmem>>, %arg6: memref<1x64xf32, #tpu.memory_space<vmem>>, %arg7: memref<1x1xf32, #tpu.memory_space<smem>>, %arg8: memref<8x1xf32, #tpu.memory_space<vmem>>, %arg9: memref<8x1x128xf32, #tpu.memory_space<vmem>>, %arg10: memref<8x1x1xf32, #tpu.memory_space<vmem>>) attributes {dimension_semantics = [#tpu.dimension_semantics<parallel>, #tpu.dimension_semantics<arbitrary>], iteration_bounds = array<i64: 2, 2>, scalar_prefetch = 0 : i64, scratch_operands = 2 : i64, tpu.core_type = #tpu.core_type<tc>, window_params = [{transform_indices = @transform_0, window_bounds = array<i64: 8, 128, 128>}, {transform_indices = @transform_1, window_bounds = array<i64: 8, 1, 128>}, {pipeline_mode = #tpu.pipeline_mode<synchronous>, transform_indices = @transform_2, window_bounds = array<i64: 128, 64>}, {pipeline_mode = #tpu.pipeline_mode<synchronous>, transform_indices = @transform_3, window_bounds = array<i64: 1, 64>}, {pipeline_mode = #tpu.pipeline_mode<synchronous>, transform_indices = @transform_4, window_bounds = array<i64: 1, 64>}, {transform_indices = @transform_5, window_bounds = array<i64: 1, 1>}, {transform_indices = @transform_6, window_bounds = array<i64: 8, 1>}]} {
    %c0_i32 = arith.constant 0 : i32
    %0 = arith.cmpi eq, %arg1, %c0_i32 : i32
    %1 = arith.extui %0 : i1 to i32
    %c0_i32_0 = arith.constant 0 : i32
    %2 = arith.cmpi ne, %1, %c0_i32_0 : i32
    scf.if %2 {
      %cst_20 = arith.constant 0.000000e+00 : f32
      %18 = vector.broadcast %cst_20 : f32 to vector<8x1x128xf32>
      %c0_21 = arith.constant 0 : index
      %c0_22 = arith.constant 0 : index
      %c0_23 = arith.constant 0 : index
      %19 = vector.load %arg9[%c0_21, %c0_22, %c0_23] : memref<8x1x128xf32, #tpu.memory_space<vmem>>, vector<8x1x128xf32>
      tpu.vector_store %arg9[%c0_21, %c0_22, %c0_23], %18 {strides = array<i32>} : memref<8x1x128xf32, #tpu.memory_space<vmem>>, vector<8x1x128xf32>,
      %cst_24 = arith.constant 0.000000e+00 : f32
      %20 = vector.broadcast %cst_24 : f32 to vector<8x1x1xf32>
      %c0_25 = arith.constant 0 : index
      %c0_26 = arith.constant 0 : index
      %c0_27 = arith.constant 0 : index
      %21 = vector.load %arg10[%c0_25, %c0_26, %c0_27] : memref<8x1x1xf32, #tpu.memory_space<vmem>>, vector<8x1x1xf32>
      tpu.vector_store %arg10[%c0_25, %c0_26, %c0_27], %20 {strides = array<i32>} : memref<8x1x1xf32, #tpu.memory_space<vmem>>, vector<8x1x1xf32>,
    } else {
    }
    %c0 = arith.constant 0 : index
    %c0_1 = arith.constant 0 : index
    %c0_2 = arith.constant 0 : index
    %3 = vector.load %arg3[%c0, %c0_1, %c0_2] : memref<8x1x128xbf16, #tpu.memory_space<vmem>>, vector<8x1x128xbf16>
    %c0_3 = arith.constant 0 : index
    %c0_4 = arith.constant 0 : index
    %c0_5 = arith.constant 0 : index
    %4 = vector.load %arg2[%c0_3, %c0_4, %c0_5] : memref<8x128x128xbf16, #tpu.memory_space<vmem>>, vector<8x128x128xbf16>
    %c0_6 = arith.constant 0 : index
    %c0_7 = arith.constant 0 : index
    %c0_8 = arith.constant 0 : index
    %5 = vector.load %arg9[%c0_6, %c0_7, %c0_8] : memref<8x1x128xf32, #tpu.memory_space<vmem>>, vector<8x1x128xf32>
    "tpu.trace_start"() <{level = 10 : i32, message = "bxs,bsh->bxh"}> : () -> ()
    %cst = arith.constant dense<0.000000e+00> : vector<8x1x128xf32>
    %6 = tpu.matmul %3, %4, %cst {dimension_numbers = #tpu.dot_dimension_numbers<[2], [1], [1], [2], [0, 0, 0, 1, 1, 2], [0], [0]>} : vector<8x1x128xbf16>, vector<8x128x128xbf16>, vector<8x1x128xf32> -> vector<8x1x128xf32>
    "tpu.trace_stop"() : () -> ()
    %7 = arith.addf %5, %6 : vector<8x1x128xf32>
    %c0_9 = arith.constant 0 : index
    %c0_10 = arith.constant 0 : index
    %c0_11 = arith.constant 0 : index
    %8 = vector.load %arg9[%c0_9, %c0_10, %c0_11] : memref<8x1x128xf32, #tpu.memory_space<vmem>>, vector<8x1x128xf32>
    tpu.vector_store %arg9[%c0_9, %c0_10, %c0_11], %7 {strides = array<i32>} : memref<8x1x128xf32, #tpu.memory_space<vmem>>, vector<8x1x128xf32>,
    %c0_12 = arith.constant 0 : index
    %c0_13 = arith.constant 0 : index
    %c0_14 = arith.constant 0 : index
    %9 = vector.load %arg10[%c0_12, %c0_13, %c0_14] : memref<8x1x1xf32, #tpu.memory_space<vmem>>, vector<8x1x1xf32>
    %10 = arith.extf %3 : vector<8x1x128xbf16> to vector<8x1x128xf32>
    %cst_15 = arith.constant dense<0.000000e+00> : vector<8x1xf32>
    %11 = vector.multi_reduction <add>, %10, %cst_15 [2] : vector<8x1x128xf32> to vector<8x1xf32>
    %12 = vector.shape_cast %11 : vector<8x1xf32> to vector<8x1x1xf32>
    %13 = arith.addf %9, %12 : vector<8x1x1xf32>
    %c0_16 = arith.constant 0 : index
    %c0_17 = arith.constant 0 : index
    %c0_18 = arith.constant 0 : index
    %14 = vector.load %arg10[%c0_16, %c0_17, %c0_18] : memref<8x1x1xf32, #tpu.memory_space<vmem>>, vector<8x1x1xf32>
    tpu.vector_store %arg10[%c0_16, %c0_17, %c0_18], %13 {strides = array<i32>} : memref<8x1x1xf32, #tpu.memory_space<vmem>>, vector<8x1x1xf32>,
    %c1_i32 = arith.constant 1 : i32
    %15 = arith.cmpi eq, %arg1, %c1_i32 : i32
    %16 = arith.extui %15 : i1 to i32
    %c0_i32_19 = arith.constant 0 : i32
    %17 = arith.cmpi ne, %16, %c0_i32_19 : i32
    scf.if %17 {
      %c0_20 = arith.constant 0 : index
      %c0_21 = arith.constant 0 : index
      %c0_22 = arith.constant 0 : index
      %18 = vector.load %arg10[%c0_20, %c0_21, %c0_22] : memref<8x1x1xf32, #tpu.memory_space<vmem>>, vector<8x1x1xf32>
      %19 = vector.shape_cast %18 : vector<8x1x1xf32> to vector<8x1xf32>
      %cst_23 = arith.constant 1.000000e+00 : f32
      %20 = vector.broadcast %cst_23 : f32 to vector<8x1xf32>
      %21 = arith.maximumf %19, %20 : vector<8x1xf32>
      %22 = tpu.reciprocal %21 {approx = true} : vector<8x1xf32> -> vector<8x1xf32>
      %c0_24 = arith.constant 0 : index
      %c0_25 = arith.constant 0 : index
      %c0_26 = arith.constant 0 : index
      %23 = vector.load %arg9[%c0_24, %c0_25, %c0_26] : memref<8x1x128xf32, #tpu.memory_space<vmem>>, vector<8x1x128xf32>
      %24 = vector.shape_cast %23 : vector<8x1x128xf32> to vector<8x128xf32>
      %25 = vector.broadcast %22 : vector<8x1xf32> to vector<8x128xf32>
      %26 = arith.mulf %24, %25 : vector<8x128xf32>
      %27 = arith.truncf %26 : vector<8x128xf32> to vector<8x128xbf16>
      %c0_27 = arith.constant 0 : index
      %c0_28 = arith.constant 0 : index
      %28 = vector.load %arg4[%c0_27, %c0_28] : memref<128x64xbf16, #tpu.memory_space<vmem>>, vector<128x64xbf16>
      %cst_29 = arith.constant dense<0.000000e+00> : vector<8x64xf32>
      %29 = tpu.matmul %27, %28, %cst_29 {dimension_numbers = #tpu.dot_dimension_numbers<[1], [0], [0], [1], [0, 0, 1, 1], [], []>} : vector<8x128xbf16>, vector<128x64xbf16>, vector<8x64xf32> -> vector<8x64xf32>
      %c0_30 = arith.constant 0 : index
      %c0_31 = arith.constant 0 : index
      %30 = vector.load %arg5[%c0_30, %c0_31] : memref<1x64xf32, #tpu.memory_space<vmem>>, vector<1x64xf32>
      %31 = vector.broadcast %30 : vector<1x64xf32> to vector<8x64xf32>
      %32 = arith.addf %29, %31 : vector<8x64xf32>
      %cst_32 = arith.constant 0.000000e+00 : f32
      %33 = vector.broadcast %cst_32 : f32 to vector<8x64xf32>
      %34 = arith.maximumf %32, %33 : vector<8x64xf32>
      %c0_33 = arith.constant 0 : index
      %c0_34 = arith.constant 0 : index
      %35 = vector.load %arg6[%c0_33, %c0_34] : memref<1x64xf32, #tpu.memory_space<vmem>>, vector<1x64xf32>
      %36 = vector.broadcast %35 : vector<1x64xf32> to vector<8x64xf32>
      %37 = arith.mulf %34, %36 : vector<8x64xf32>
      %cst_35 = arith.constant dense<0.000000e+00> : vector<8xf32>
      %38 = vector.multi_reduction <add>, %37, %cst_35 [1] : vector<8x64xf32> to vector<8xf32>
      %39 = vector.shape_cast %38 : vector<8xf32> to vector<8x1xf32>
      %c0_36 = arith.constant 0 : index
      %c0_37 = arith.constant 0 : index
      %40 = memref.load %arg7[%c0_36, %c0_37] : memref<1x1xf32, #tpu.memory_space<smem>>
      %41 = vector.broadcast %40 : f32 to vector<8x1xf32>
      %42 = arith.addf %39, %41 : vector<8x1xf32>
      %c0_38 = arith.constant 0 : index
      %c0_39 = arith.constant 0 : index
      %43 = vector.load %arg8[%c0_38, %c0_39] : memref<8x1xf32, #tpu.memory_space<vmem>>, vector<8x1xf32>
      tpu.vector_store %arg8[%c0_38, %c0_39], %42 {strides = array<i32>} : memref<8x1xf32, #tpu.memory_space<vmem>>, vector<8x1xf32>,
    } else {
    }
    return
  }
  func.func @transform_0(%arg0: i32, %arg1: i32) -> (i32, i32, i32) {
    %c0_i32 = arith.constant 0 : i32
    %c0_i32_0 = arith.constant 0 : i32
    return %arg0, %arg1, %c0_i32 : i32, i32, i32
  }
  func.func @transform_1(%arg0: i32, %arg1: i32) -> (i32, i32, i32) {
    %c0_i32 = arith.constant 0 : i32
    %c0_i32_0 = arith.constant 0 : i32
    return %arg0, %c0_i32, %arg1 : i32, i32, i32
  }
  func.func @transform_2(%arg0: i32, %arg1: i32) -> (i32, i32) {
    %c0_i32 = arith.constant 0 : i32
    %c0_i32_0 = arith.constant 0 : i32
    %c0_i32_1 = arith.constant 0 : i32
    return %c0_i32, %c0_i32_0 : i32, i32
  }
  func.func @transform_3(%arg0: i32, %arg1: i32) -> (i32, i32) {
    %c0_i32 = arith.constant 0 : i32
    %c0_i32_0 = arith.constant 0 : i32
    %c0_i32_1 = arith.constant 0 : i32
    return %c0_i32, %c0_i32_0 : i32, i32
  }
  func.func @transform_4(%arg0: i32, %arg1: i32) -> (i32, i32) {
    %c0_i32 = arith.constant 0 : i32
    %c0_i32_0 = arith.constant 0 : i32
    %c0_i32_1 = arith.constant 0 : i32
    return %c0_i32, %c0_i32_0 : i32, i32
  }
  func.func @transform_5(%arg0: i32, %arg1: i32) -> (i32, i32) {
    %c0_i32 = arith.constant 0 : i32
    %c0_i32_0 = arith.constant 0 : i32
    %c0_i32_1 = arith.constant 0 : i32
    return %c0_i32, %c0_i32_0 : i32, i32
  }
  func.func @transform_6(%arg0: i32, %arg1: i32) -> (i32, i32) {
    %c0_i32 = arith.constant 0 : i32
    %c0_i32_0 = arith.constant 0 : i32
    return %arg0, %c0_i32 : i32, i32
  }
}

</mosaic_0001>

<llo_original>
// kernel: tpu_custom_call.1
$region0: #{tpu_custom_call.1}
  #allocation0 [shape = 'u32[]', space=smem, size = 0x4, offset = 0x4, fixed_abs, tag = 'smem constant byte address 0x4 - core index']
  #allocation1 [shape = 'u32[144,128]{1,0:T(1,128)}', space=vmem, size = 0x12000, scoped, tag = 'internal scratch']
  #allocation2 [shape = 'f32[8,1,128]{2,1,0:T(1,128)}', space=vmem, size = 0x1000, scoped, tag = 'scratch operand']
  #allocation3 [shape = 'f32[8,1,1]{2,1,0:T(1,128)}', space=vmem, size = 0x1000, scoped, tag = 'scratch operand']
  #allocation4 [shape = 'f32[1,1]{1,0:T(1,128)S(6)}', space=smem, size = 0x200, scoped, tag = 'scoped memory for tpu_custom_call.1']
  #allocation8 [shape = 's32[]', space=sflag, size = 0x4, offset = 0, fixed_abs, tag = 'sflag constant byte address 0x0 - dummy sync flag']
  %s0 = inlined_call_operand.hbm [shape: bf16[16,256,128], index: 0, kind: input, shape index: {}]
  %s1 = inlined_call_operand.vmem [shape: bf16[16,1,256], index: 1, kind: input, shape index: {}]
  %s2 = inlined_call_operand.vmem [shape: bf16[128,64], index: 2, kind: input, shape index: {}]
  %s3 = inlined_call_operand.vmem [shape: f32[1,64], index: 3, kind: input, shape index: {}]
  %s4 = inlined_call_operand.vmem [shape: f32[1,64], index: 4, kind: input, shape index: {}]
  %s5 = inlined_call_operand.<no memory space> [shape: f32[1,1], index: 5, kind: input, shape index: {}]
  %s6 = inlined_call_operand.vmem [shape: f32[16,1], index: 6, kind: output, shape index: {}]
  %s7 = sld [smem:[#allocation0]]
  $region110: #{tpu_custom_call.1} parent=0
    _
  %s9 = ssub.s32 1, %s7
  %s10 = scalar_select 0, %s9, %s7
  %11 = sst [smem:[#allocation4]] %s5
  $region1: #{tpu_custom_call.1} parent=0
    #allocation5 [shape = 'u8[524288]{0}', space=vmem, size = 0x80000, scoped, tag = 'input window, operand 0']
    #allocation6 [shape = 's32[2]{0}', space=sflag, size = 0x8, scoped, tag = 'scoped memory for tpu_custom_call.1']
    #allocation7 [shape = 'u8[8192]{0}', space=vmem, size = 0x2000, scoped, tag = 'input window, operand 1']
    %12 = vsyncpa [#allocation6], 0
    %s13 = scalar_lea.sflag [#allocation6], 1
    %14 = vsyncpa %s13, 0
    loop: start=0, step=1, limit=6
    $region2: #{tpu_custom_call.1} parent=1 // loop_pre_header
      _
    $region3: #{tpu_custom_call.1} parent=1 // loop_header
      %s16 = sphi 0, %s20
      %p17 = scmp.ge.s32.totalorder %s16, 6
      %s23 = sphi 0, %s35
      %s24 = sphi 0, %s31
      %s25 = sphi 0, %s23
      %s26 = sphi 0, %s24
      %s27 = sphi 0, %s25
      %s28 = sphi 0, %s26
      %s40 = sphi 0, %s42
      %s43 = sphi 0, %s40
      %s44 = sphi 0, %s43
      %s60 = sphi 0, %s44
      %s68 = sphi 0, %s70
      %s71 = sphi 0, %s68
      %s72 = sphi 0, %s71
      %s88 = sphi 0, %s72
      %s92 = sphi 0, %s92
      %s94 = sphi 0, %s92
      %s95 = sphi 0, %s94
      %s109 = sphi 0, %s95
      %s113 = sphi 0, %s113
      %s115 = sphi 0, %s113
      %s116 = sphi 0, %s115
      %s130 = sphi 0, %s116
      %s134 = sphi 0, %s134
      %s136 = sphi 0, %s134
      %s137 = sphi 0, %s136
      %s151 = sphi 0, %s137
      %s155 = sphi 0, %s155
      %s157 = sphi 0, %s155
      %s158 = sphi 0, %s157
      %s172 = sphi 0, %s158
      %s178 = sphi 0, %s180
      %s181 = sphi 0, %s178
      %s182 = sphi 0, %s181
      %s198 = sphi 0, %s182
    $region4: #{tpu_custom_call.1} parent=1 // loop_header_branch
      %19 = sbr.rel (%p17) target = $region8
    $region5: #{tpu_custom_call.1} parent=1 // loop_body
      %s21 = ssub.s32 %s16, 1
      %s22 = ssub.s32 %s16, 2
      %s29 = sadd.s32 1, %s24
      %p30 = scmp.ge.s32.totalorder %s29, 2
      %s31 = scalar_select %p30, 0, %s29
      %s32 = sadd.s32 1, %s23
      %s33 = scalar_select %p30, %s32, %s23
      %p34 = scmp.ge.s32.totalorder %s33, 2
      %s35 = scalar_select %p34, 0, %s33
      %s36 = ssub.s32 %s23, %s35
      %s37 = ssub.s32 %s24, %s31
      %s38 = sor.u32 %s36, %s37
      %p39 = scmp.eq.s32.totalorder %s38, 0
      %s41 = sadd.s32 %s40, 1
      %s42 = scalar_select %p39, %s40, %s41
      %p45 = pneg %p39
      %p46 = scmp.eq.s32.totalorder %s16, 3
      %p47 = por %p45, %p46
      %p48 = scmp.ne.s32.totalorder %s40, %s43
      %p49 = scmp.eq.s32.totalorder %s16, 0
      %p50 = por %p48, %p49
      %p51 = scmp.ne.s32.totalorder %s40, %s43
      %p52 = scmp.eq.s32.totalorder %s21, 3
      %p53 = por %p51, %p52
      %p54 = scmp.ne.s32.totalorder %s43, %s44
      %p55 = scmp.eq.s32.totalorder %s21, 0
      %p56 = por %p54, %p55
      %p57 = scmp.ne.s32.totalorder %s43, %s44
      %p58 = scmp.eq.s32.totalorder %s22, 3
      %p59 = por %p57, %p58
      %p61 = scmp.ne.s32.totalorder %s44, %s60
      %p62 = scmp.eq.s32.totalorder %s22, 0
      %p63 = por %p61, %p62
      %s64 = ssub.s32 %s23, %s35
      %s65 = ssub.s32 %s24, %s31
      %s66 = sor.u32 %s64, %s65
      %p67 = scmp.eq.s32.totalorder %s66, 0
      %s69 = sadd.s32 %s68, 1
      %s70 = scalar_select %p67, %s68, %s69
      %p73 = pneg %p67
      %p74 = scmp.eq.s32.totalorder %s16, 3
      %p75 = por %p73, %p74
      %p76 = scmp.ne.s32.totalorder %s68, %s71
      %p77 = scmp.eq.s32.totalorder %s16, 0
      %p78 = por %p76, %p77
      %p79 = scmp.ne.s32.totalorder %s68, %s71
      %p80 = scmp.eq.s32.totalorder %s21, 3
      %p81 = por %p79, %p80
      %p82 = scmp.ne.s32.totalorder %s71, %s72
      %p83 = scmp.eq.s32.totalorder %s21, 0
      %p84 = por %p82, %p83
      %p85 = scmp.ne.s32.totalorder %s71, %s72
      %p86 = scmp.eq.s32.totalorder %s22, 3
      %p87 = por %p85, %p86
      %p89 = scmp.ne.s32.totalorder %s72, %s88
      %p90 = scmp.eq.s32.totalorder %s22, 0
      %p91 = por %p89, %p90
      %s93 = sadd.s32 %s92, 1
      %p96 = scmp.eq.s32.totalorder %s16, 3
      %p97 = scmp.ne.s32.totalorder %s92, %s94
      %p98 = scmp.eq.s32.totalorder %s16, 0
      %p99 = por %p97, %p98
      %p100 = scmp.ne.s32.totalorder %s92, %s94
      %p101 = scmp.eq.s32.totalorder %s21, 3
      %p102 = por %p100, %p101
      %p103 = scmp.ne.s32.totalorder %s94, %s95
      %p104 = scmp.eq.s32.totalorder %s21, 0
      %p105 = por %p103, %p104
      %p106 = scmp.ne.s32.totalorder %s94, %s95
      %p107 = scmp.eq.s32.totalorder %s22, 3
      %p108 = por %p106, %p107
      %p110 = scmp.ne.s32.totalorder %s95, %s109
      %p111 = scmp.eq.s32.totalorder %s22, 0
      %p112 = por %p110, %p111
      %s114 = sadd.s32 %s113, 1
      %p117 = scmp.eq.s32.totalorder %s16, 3
      %p118 = scmp.ne.s32.totalorder %s113, %s115
      %p119 = scmp.eq.s32.totalorder %s16, 0
      %p120 = por %p118, %p119
      %p121 = scmp.ne.s32.totalorder %s113, %s115
      %p122 = scmp.eq.s32.totalorder %s21, 3
      %p123 = por %p121, %p122
      %p124 = scmp.ne.s32.totalorder %s115, %s116
      %p125 = scmp.eq.s32.totalorder %s21, 0
      %p126 = por %p124, %p125
      %p127 = scmp.ne.s32.totalorder %s115, %s116
      %p128 = scmp.eq.s32.totalorder %s22, 3
      %p129 = por %p127, %p128
      %p131 = scmp.ne.s32.totalorder %s116, %s130
      %p132 = scmp.eq.s32.totalorder %s22, 0
      %p133 = por %p131, %p132
      %s135 = sadd.s32 %s134, 1
      %p138 = scmp.eq.s32.totalorder %s16, 3
      %p139 = scmp.ne.s32.totalorder %s134, %s136
      %p140 = scmp.eq.s32.totalorder %s16, 0
      %p141 = por %p139, %p140
      %p142 = scmp.ne.s32.totalorder %s134, %s136
      %p143 = scmp.eq.s32.totalorder %s21, 3
      %p144 = por %p142, %p143
      %p145 = scmp.ne.s32.totalorder %s136, %s137
      %p146 = scmp.eq.s32.totalorder %s21, 0
      %p147 = por %p145, %p146
      %p148 = scmp.ne.s32.totalorder %s136, %s137
      %p149 = scmp.eq.s32.totalorder %s22, 3
      %p150 = por %p148, %p149
      %p152 = scmp.ne.s32.totalorder %s137, %s151
      %p153 = scmp.eq.s32.totalorder %s22, 0
      %p154 = por %p152, %p153
      %s156 = sadd.s32 %s155, 1
      %p159 = scmp.eq.s32.totalorder %s16, 3
      %p160 = scmp.ne.s32.totalorder %s155, %s157
      %p161 = scmp.eq.s32.totalorder %s16, 0
      %p162 = por %p160, %p161
      %p163 = scmp.ne.s32.totalorder %s155, %s157
      %p164 = scmp.eq.s32.totalorder %s21, 3
      %p165 = por %p163, %p164
      %p166 = scmp.ne.s32.totalorder %s157, %s158
      %p167 = scmp.eq.s32.totalorder %s21, 0
      %p168 = por %p166, %p167
      %p169 = scmp.ne.s32.totalorder %s157, %s158
      %p170 = scmp.eq.s32.totalorder %s22, 3
      %p171 = por %p169, %p170
      %p173 = scmp.ne.s32.totalorder %s158, %s172
      %p174 = scmp.eq.s32.totalorder %s22, 0
      %p175 = por %p173, %p174
      %s176 = ssub.s32 %s23, %s35
      %p177 = scmp.eq.s32.totalorder %s176, 0
      %s179 = sadd.s32 %s178, 1
      %s180 = scalar_select %p177, %s178, %s179
      %p183 = pneg %p177
      %p184 = scmp.eq.s32.totalorder %s16, 3
      %p185 = por %p183, %p184
      %p186 = scmp.ne.s32.totalorder %s178, %s181
      %p187 = scmp.eq.s32.totalorder %s16, 0
      %p188 = por %p186, %p187
      %p189 = scmp.ne.s32.totalorder %s178, %s181
      %p190 = scmp.eq.s32.totalorder %s21, 3
      %p191 = por %p189, %p190
      %p192 = scmp.ne.s32.totalorder %s181, %s182
      %p193 = scmp.eq.s32.totalorder %s21, 0
      %p194 = por %p192, %p193
      %p195 = scmp.ne.s32.totalorder %s181, %s182
      %p196 = scmp.eq.s32.totalorder %s22, 3
      %p197 = por %p195, %p196
      %p199 = scmp.ne.s32.totalorder %s182, %s198
      %p200 = scmp.eq.s32.totalorder %s22, 0
      %p201 = por %p199, %p200
      %p202 = scmp.le.s32.totalorder 1, %s16
      %p203 = scmp.lt.s32.totalorder %s16, 5
      %p204 = pnand %p202, %p203
      %p205 = pneg %p204
      // Predicated region
      $region9: #{tpu_custom_call.1} parent=5 // pred_check
        _
      $region10: #{tpu_custom_call.1} parent=5 // pred_check_branch
        %207 = sbr.rel (%p204) target = $region12
      $region11: #{tpu_custom_call.1} parent=5 // pred_region
        %s208 = ssub.s32 %s16, 1
        // Predicated region
        $region13: #{tpu_custom_call.1} parent=11 // pred_check
          %p209 = pneg %p105
        $region14: #{tpu_custom_call.1} parent=11 // pred_check_branch
          %211 = sbr.rel (%p209) target = $region16
        $region15: #{tpu_custom_call.1} parent=11 // pred_region
          _
        $region16: #{tpu_custom_call.1} parent=11 // pred_fallthru
          _
        // Predicated region
        $region17: #{tpu_custom_call.1} parent=11 // pred_check
          %p212 = pneg %p126
        $region18: #{tpu_custom_call.1} parent=11 // pred_check_branch
          %214 = sbr.rel (%p212) target = $region20
        $region19: #{tpu_custom_call.1} parent=11 // pred_region
          _
        $region20: #{tpu_custom_call.1} parent=11 // pred_fallthru
          _
        // Predicated region
        $region21: #{tpu_custom_call.1} parent=11 // pred_check
          %p215 = pneg %p147
        $region22: #{tpu_custom_call.1} parent=11 // pred_check_branch
          %217 = sbr.rel (%p215) target = $region24
        $region23: #{tpu_custom_call.1} parent=11 // pred_region
          _
        $region24: #{tpu_custom_call.1} parent=11 // pred_fallthru
          _
        // Predicated region
        $region25: #{tpu_custom_call.1} parent=11 // pred_check
          %p218 = pneg %p168
        $region26: #{tpu_custom_call.1} parent=11 // pred_check_branch
          %220 = sbr.rel (%p218) target = $region28
        $region27: #{tpu_custom_call.1} parent=11 // pred_region
          _
        $region28: #{tpu_custom_call.1} parent=11 // pred_fallthru
          _
      $region12: #{tpu_custom_call.1} parent=5 // pred_fallthru
        _
      %p221 = scmp.lt.s32.totalorder %s16, 4
      // Predicated region
      $region29: #{tpu_custom_call.1} parent=5 // pred_check
        %p222 = pneg %p221
      $region30: #{tpu_custom_call.1} parent=5 // pred_check_branch
        %224 = sbr.rel (%p222) target = $region32
      $region31: #{tpu_custom_call.1} parent=5 // pred_region
        // Predicated region
        $region33: #{tpu_custom_call.1} parent=31 // pred_check
          %p225 = pneg %p50
        $region34: #{tpu_custom_call.1} parent=31 // pred_check_branch
          %227 = sbr.rel (%p225) target = $region36
        $region35: #{tpu_custom_call.1} parent=31 // pred_region
          #allocation9 [shape = 'u32[6]{0}', space=smem, size = 0x18, scoped, tag = 'DMA stride descriptor']
          %s228 = sand.u32 %s40, 1
          %s229 = scalar_lea.sflag [#allocation6], %s228
          %s230 = sand.u32 %s40, 1
          %s231 = smul.addr %s230, 512
          %s232 = scalar_lea.vmem [#allocation5], %s231
          %s233 = smul.u32 8, %s23
          %s234 = smul.u32 16, %s24
          %s236 = ssub.s32 8192, 8192
          %237 = vsyncadd %s229, %s236
          %s238 = smul.addr %s233, 32
          %s239 = sadd.s32 %s234, %s238
          %s240 = smul.addr %s239, 64
          %s241 = scalar_lea.hbm %s0, %s240
          %s243 = sshll.u32 1, 14
          %s244 = sxor.u32 4294967295, %s243
          %s246 = sld [smem:[#allocation0]]
          %s247 = sadd.s32 2, %s246
          %s249 = sshll.u32 7, 26
          %s250 = sxor.u32 4294967295, %s249
          %s251 = sand.u32 0, %s250
          %s252 = sshll.u32 %s247, 26
          %s253 = sor.u32 %s251, %s252
          %s254 = sshll.u32 %s232, 4
          %s255 = int_to_ptr.vmem [resolvable:$true] %s254
          %261 = sst [smem:[#allocation9]] 2048
          %s262 = scalar_lea.smem [#allocation9], 1
          %263 = sst [smem:[%s262]] 1024
          %s264 = scalar_lea.smem [#allocation9], 2
          %265 = sst [smem:[%s264]] 16
          %s266 = scalar_lea.smem [#allocation9], 3
          %267 = sst [smem:[%s266]] 64
          %s268 = scalar_lea.smem [#allocation9], 4
          %269 = sst [smem:[%s268]] 64
          %s270 = scalar_lea.smem [#allocation9], 5
          %271 = sst [smem:[%s270]] 4
          %273 = dma.general %s241, 8192, %s255, %s229, [#allocation8], [#allocation9], %s253, 0
        $region36: #{tpu_custom_call.1} parent=31 // pred_fallthru
          _
        // Predicated region
        $region37: #{tpu_custom_call.1} parent=31 // pred_check
          %p274 = pneg %p78
        $region38: #{tpu_custom_call.1} parent=31 // pred_check_branch
          %276 = sbr.rel (%p274) target = $region40
        $region39: #{tpu_custom_call.1} parent=31 // pred_region
          %s277 = sand.u32 %s68, 1
          %s278 = sand.u32 %s68, 1
          %s279 = smul.addr %s278, 8
          %s280 = scalar_lea.vmem [#allocation7], %s279
          %s281 = smul.u32 8, %s23
          %s282 = smul.addr %s281, 2
          %s283 = sadd.s32 %s24, %s282
          %s284 = scalar_lea.vmem %s1, %s283
          // Predicated region
          $region41: #{tpu_custom_call.1} parent=39 // pred_check
            _
          $region42: #{tpu_custom_call.1} parent=39 // pred_check_branch
            %286 = sbr.rel (0) target = $region44
          $region43: #{tpu_custom_call.1} parent=39 // pred_region
            // Predicated region
            $region45: #{tpu_custom_call.1} parent=43 // pred_check
              _
            $region46: #{tpu_custom_call.1} parent=43 // pred_check_branch
              %288 = sbr.rel target = $region48
            $region47: #{tpu_custom_call.1} parent=43 // pred_region
              // Predicated region
              $region60: #{tpu_custom_call.1} parent=47 // pred_check
                _
              $region61: #{tpu_custom_call.1} parent=47 // pred_check_branch
                %317 = sbr.rel (0) target = $region63
              $region62: #{tpu_custom_call.1} parent=47 // pred_region
                loop: start=0, step=1, limit=1
                $region64: #{tpu_custom_call.1} parent=62 // loop_pre_header
                  _
                $region65: #{tpu_custom_call.1} parent=62 // loop_header
                  %s319 = sphi 0, %s323
                  %p320 = scmp.ge.s32.totalorder %s319, 1
                  %s324 = sphi %s284, %s284
                  %s325 = sphi %s280, %s280
                $region66: #{tpu_custom_call.1} parent=62 // loop_header_branch
                  %322 = sbr.rel (%p320) target = $region70
                $region67: #{tpu_custom_call.1} parent=62 // loop_body
                  _
                $region68: #{tpu_custom_call.1} parent=62 // loop_footer
                  %s323 = sadd.s32 1, %s319
                $region69: #{tpu_custom_call.1} parent=62 // loop_footer_branch
                  %318 = sbr.rel target = $region65
                $region70: #{tpu_custom_call.1} parent=62 // loop_exit
                  _
                loop: start=0, step=1, limit=1
                $region71: #{tpu_custom_call.1} parent=62 // loop_pre_header
                  _
                $region72: #{tpu_custom_call.1} parent=62 // loop_header
                  %s328 = sphi 0, %s332
                  %p329 = scmp.ge.s32.totalorder %s328, 1
                  %s333 = sphi %s284, %s284
                  %s334 = sphi %s280, %s280
                $region73: #{tpu_custom_call.1} parent=62 // loop_header_branch
                  %331 = sbr.rel (%p329) target = $region77
                $region74: #{tpu_custom_call.1} parent=62 // loop_body
                  %v335 = vld [vmem:[%s333] sm:$0x1]
                  %336 = vst [vmem:[%s334] sm:$0x1] %v335
                  %v337 = vld [vmem:[%s333 + $0x2] sm:$0x1]
                  %338 = vst [vmem:[%s334 + $0x1] sm:$0x1] %v337
                  %v339 = vld [vmem:[%s333 + $0x4] sm:$0x1]
                  %340 = vst [vmem:[%s334 + $0x2] sm:$0x1] %v339
                  %v341 = vld [vmem:[%s333 + $0x6] sm:$0x1]
                  %342 = vst [vmem:[%s334 + $0x3] sm:$0x1] %v341
                  %v343 = vld [vmem:[%s333 + $0x8] sm:$0x1]
                  %344 = vst [vmem:[%s334 + $0x4] sm:$0x1] %v343
                  %v345 = vld [vmem:[%s333 + $0xa] sm:$0x1]
                  %346 = vst [vmem:[%s334 + $0x5] sm:$0x1] %v345
                  %v347 = vld [vmem:[%s333 + $0xc] sm:$0x1]
                  %348 = vst [vmem:[%s334 + $0x6] sm:$0x1] %v347
                  %v349 = vld [vmem:[%s333 + $0xe] sm:$0x1]
                  %350 = vst [vmem:[%s334 + $0x7] sm:$0x1] %v349
                $region75: #{tpu_custom_call.1} parent=62 // loop_footer
                  %s332 = sadd.s32 1, %s328
                $region76: #{tpu_custom_call.1} parent=62 // loop_footer_branch
                  %327 = sbr.rel target = $region72
                $region77: #{tpu_custom_call.1} parent=62 // loop_exit
                  _
              $region63: #{tpu_custom_call.1} parent=47 // pred_fallthru
                _
            $region48: #{tpu_custom_call.1} parent=43 // pred_fallthru
              _
            // Predicated region
            $region49: #{tpu_custom_call.1} parent=43 // pred_check
              _
            $region50: #{tpu_custom_call.1} parent=43 // pred_check_branch
              %290 = sbr.rel (0) target = $region52
            $region51: #{tpu_custom_call.1} parent=43 // pred_region
              loop: start=0, step=1, limit=1
              $region53: #{tpu_custom_call.1} parent=51 // loop_pre_header
                _
              $region54: #{tpu_custom_call.1} parent=51 // loop_header
                %s293 = sphi 0, %s297
                %p294 = scmp.ge.s32.totalorder %s293, 1
                %s298 = sphi %s284, %s284
                %s299 = sphi %s280, %s280
              $region55: #{tpu_custom_call.1} parent=51 // loop_header_branch
                %296 = sbr.rel (%p294) target = $region59
              $region56: #{tpu_custom_call.1} parent=51 // loop_body
                %v300 = vld [vmem:[%s298] sm:$0x1]
                %301 = vst [vmem:[%s299] sm:$0x1] %v300
                %v302 = vld [vmem:[%s298 + $0x2] sm:$0x1]
                %303 = vst [vmem:[%s299 + $0x1] sm:$0x1] %v302
                %v304 = vld [vmem:[%s298 + $0x4] sm:$0x1]
                %305 = vst [vmem:[%s299 + $0x2] sm:$0x1] %v304
                %v306 = vld [vmem:[%s298 + $0x6] sm:$0x1]
                %307 = vst [vmem:[%s299 + $0x3] sm:$0x1] %v306
                %v308 = vld [vmem:[%s298 + $0x8] sm:$0x1]
                %309 = vst [vmem:[%s299 + $0x4] sm:$0x1] %v308
                %v310 = vld [vmem:[%s298 + $0xa] sm:$0x1]
                %311 = vst [vmem:[%s299 + $0x5] sm:$0x1] %v310
                %v312 = vld [vmem:[%s298 + $0xc] sm:$0x1]
                %313 = vst [vmem:[%s299 + $0x6] sm:$0x1] %v312
                %v314 = vld [vmem:[%s298 + $0xe] sm:$0x1]
                %315 = vst [vmem:[%s299 + $0x7] sm:$0x1] %v314
              $region57: #{tpu_custom_call.1} parent=51 // loop_footer
                %s297 = sadd.s32 1, %s293
              $region58: #{tpu_custom_call.1} parent=51 // loop_footer_branch
                %292 = sbr.rel target = $region54
              $region59: #{tpu_custom_call.1} parent=51 // loop_exit
                _
            $region52: #{tpu_custom_call.1} parent=43 // pred_fallthru
              _
          $region44: #{tpu_custom_call.1} parent=39 // pred_fallthru
            _
          %351 = vnop
        $region40: #{tpu_custom_call.1} parent=31 // pred_fallthru
          _
      $region32: #{tpu_custom_call.1} parent=5 // pred_fallthru
        _
      %p352 = scmp.le.s32.totalorder 1, %s16
      %p353 = scmp.lt.s32.totalorder %s16, 5
      %p354 = pnand %p352, %p353
      %p355 = pneg %p354
      // Predicated region
      $region78: #{tpu_custom_call.1} parent=5 // pred_check
        _
      $region79: #{tpu_custom_call.1} parent=5 // pred_check_branch
        %357 = sbr.rel (%p354) target = $region81
      $region80: #{tpu_custom_call.1} parent=5 // pred_region
        %s358 = ssub.s32 %s16, 1
        %s359 = sand.u32 %s43, 1
        %s360 = scalar_lea.sflag [#allocation6], %s359
        %s361 = sand.u32 %s43, 1
        %s362 = smul.addr %s361, 512
        %s363 = scalar_lea.vmem [#allocation5], %s362
        // Predicated region
        $region82: #{tpu_custom_call.1} parent=80 // pred_check
          %p364 = pneg %p56
        $region83: #{tpu_custom_call.1} parent=80 // pred_check_branch
          %366 = sbr.rel (%p364) target = $region85
        $region84: #{tpu_custom_call.1} parent=80 // pred_region
          %367 = dma.done %s360, 8192
        $region85: #{tpu_custom_call.1} parent=80 // pred_fallthru
          _
        %s368 = sand.u32 %s71, 1
        %s369 = sand.u32 %s71, 1
        %s370 = smul.addr %s369, 8
        %s371 = scalar_lea.vmem [#allocation7], %s370
        // Predicated region
        $region86: #{tpu_custom_call.1} parent=80 // pred_check
          %p372 = pneg %p84
        $region87: #{tpu_custom_call.1} parent=80 // pred_check_branch
          %374 = sbr.rel (%p372) target = $region89
        $region88: #{tpu_custom_call.1} parent=80 // pred_region
          _
        $region89: #{tpu_custom_call.1} parent=80 // pred_fallthru
          _
        %s375 = sand.u32 %s43, 1
        %s376 = scalar_lea.sflag [#allocation6], %s375
        %s377 = sand.u32 %s43, 1
        %s378 = smul.addr %s377, 512
        %s379 = scalar_lea.vmem [#allocation5], %s378
        %p380 = pneg %p56
        %p381 = pneg %p53
        %s382 = sand.u32 %s71, 1
        %s383 = sand.u32 %s71, 1
        %s384 = smul.addr %s383, 8
        %s385 = scalar_lea.vmem [#allocation7], %s384
        %p386 = pneg %p84
        %p387 = pneg %p81
        %p388 = pneg %p105
        %p389 = pneg %p102
        %p390 = pneg %p126
        %p391 = pneg %p123
        %p392 = pneg %p147
        %p393 = pneg %p144
        %p394 = pneg %p168
        %p395 = pneg %p165
        %p396 = pneg %p194
        %p397 = pneg %p191
        %p398 = scmp.lt.s32.totalorder %s25, 1
        %s399 = scalar_select %p398, %s25, 1
        %s400 = smul.addr %s399, 8
        %s401 = scalar_lea.vmem %s6, %s400
        %s402 = smul.u32 8, %s25
        %s403 = smul.u32 16, %s26
        %s404 = smul.u32 8, %s25
        %p405 = scmp.lt.s32.totalorder %s25, 1
        %s406 = scalar_select %p405, %s25, 1
        %s407 = smul.addr %s406, 8
        %s408 = scalar_lea.vmem %s6, %s407
        %p410 = scmp.eq.s32.totalorder %s26, 0
        // Predicated region
        $region90: #{tpu_custom_call.1} parent=80 // pred_check
          %p411 = pneg %p410
        $region91: #{tpu_custom_call.1} parent=80 // pred_check_branch
          %413 = sbr.rel (%p411) target = $region93
        $region92: #{tpu_custom_call.1} parent=80 // pred_region
          %414 = vst [vmem:[#allocation2] sm:$0x1] 0.0
          %415 = vst [vmem:[#allocation2 + $0x1] sm:$0x1] 0.0
          %416 = vst [vmem:[#allocation2 + $0x2] sm:$0x1] 0.0
          %417 = vst [vmem:[#allocation2 + $0x3] sm:$0x1] 0.0
          %418 = vst [vmem:[#allocation2 + $0x4] sm:$0x1] 0.0
          %419 = vst [vmem:[#allocation2 + $0x5] sm:$0x1] 0.0
          %420 = vst [vmem:[#allocation2 + $0x6] sm:$0x1] 0.0
          %421 = vst [vmem:[#allocation2 + $0x7] sm:$0x1] 0.0
          %vm422 = vcmask 0
          %423 = vst.msk [vmem:[#allocation3] sm:$0x1] %vm422, 0.0
          %424 = vst.msk [vmem:[#allocation3 + $0x1] sm:$0x1] %vm422, 0.0
          %425 = vst.msk [vmem:[#allocation3 + $0x2] sm:$0x1] %vm422, 0.0
          %426 = vst.msk [vmem:[#allocation3 + $0x3] sm:$0x1] %vm422, 0.0
          %427 = vst.msk [vmem:[#allocation3 + $0x4] sm:$0x1] %vm422, 0.0
          %428 = vst.msk [vmem:[#allocation3 + $0x5] sm:$0x1] %vm422, 0.0
          %429 = vst.msk [vmem:[#allocation3 + $0x6] sm:$0x1] %vm422, 0.0
          %430 = vst.msk [vmem:[#allocation3 + $0x7] sm:$0x1] %vm422, 0.0
        $region93: #{tpu_custom_call.1} parent=80 // pred_fallthru
          _
        %v431 = vld [vmem:[%s371] sm:$0x1]
        %v432 = vld [vmem:[%s371 + $0x1] sm:$0x1]
        %v433 = vld [vmem:[%s371 + $0x2] sm:$0x1]
        %v434 = vld [vmem:[%s371 + $0x3] sm:$0x1]
        %v435 = vld [vmem:[%s371 + $0x4] sm:$0x1]
        %v436 = vld [vmem:[%s371 + $0x5] sm:$0x1]
        %v437 = vld [vmem:[%s371 + $0x6] sm:$0x1]
        %v438 = vld [vmem:[%s371 + $0x7] sm:$0x1]
        %v439 = vld [vmem:[%s363] sm:$0xf]
        %v440 = vld [vmem:[%s363 + $0x4] sm:$0xf]
        %v441 = vld [vmem:[%s363 + $0x8] sm:$0xf]
        %v442 = vld [vmem:[%s363 + $0xc] sm:$0xf]
        %v443 = vld [vmem:[%s363 + $0x10] sm:$0xf]
        %v444 = vld [vmem:[%s363 + $0x14] sm:$0xf]
        %v445 = vld [vmem:[%s363 + $0x18] sm:$0xf]
        %v446 = vld [vmem:[%s363 + $0x1c] sm:$0xf]
        %v447 = vld [vmem:[%s363 + $0x20] sm:$0xf]
        %v448 = vld [vmem:[%s363 + $0x24] sm:$0xf]
        %v449 = vld [vmem:[%s363 + $0x28] sm:$0xf]
        %v450 = vld [vmem:[%s363 + $0x2c] sm:$0xf]
        %v451 = vld [vmem:[%s363 + $0x30] sm:$0xf]
        %v452 = vld [vmem:[%s363 + $0x34] sm:$0xf]
        %v453 = vld [vmem:[%s363 + $0x38] sm:$0xf]
        %v454 = vld [vmem:[%s363 + $0x3c] sm:$0xf]
        %v455 = vld [vmem:[%s363 + $0x40] sm:$0xf]
        %v456 = vld [vmem:[%s363 + $0x44] sm:$0xf]
        %v457 = vld [vmem:[%s363 + $0x48] sm:$0xf]
        %v458 = vld [vmem:[%s363 + $0x4c] sm:$0xf]
        %v459 = vld [vmem:[%s363 + $0x50] sm:$0xf]
        %v460 = vld [vmem:[%s363 + $0x54] sm:$0xf]
        %v461 = vld [vmem:[%s363 + $0x58] sm:$0xf]
        %v462 = vld [vmem:[%s363 + $0x5c] sm:$0xf]
        %v463 = vld [vmem:[%s363 + $0x60] sm:$0xf]
        %v464 = vld [vmem:[%s363 + $0x64] sm:$0xf]
        %v465 = vld [vmem:[%s363 + $0x68] sm:$0xf]
        %v466 = vld [vmem:[%s363 + $0x6c] sm:$0xf]
        %v467 = vld [vmem:[%s363 + $0x70] sm:$0xf]
        %v468 = vld [vmem:[%s363 + $0x74] sm:$0xf]
        %v469 = vld [vmem:[%s363 + $0x78] sm:$0xf]
        %v470 = vld [vmem:[%s363 + $0x7c] sm:$0xf]
        %v471 = vld [vmem:[%s363 + $0x80] sm:$0xf]
        %v472 = vld [vmem:[%s363 + $0x84] sm:$0xf]
        %v473 = vld [vmem:[%s363 + $0x88] sm:$0xf]
        %v474 = vld [vmem:[%s363 + $0x8c] sm:$0xf]
        %v475 = vld [vmem:[%s363 + $0x90] sm:$0xf]
        %v476 = vld [vmem:[%s363 + $0x94] sm:$0xf]
        %v477 = vld [vmem:[%s363 + $0x98] sm:$0xf]
        %v478 = vld [vmem:[%s363 + $0x9c] sm:$0xf]
        %v479 = vld [vmem:[%s363 + $0xa0] sm:$0xf]
        %v480 = vld [vmem:[%s363 + $0xa4] sm:$0xf]
        %v481 = vld [vmem:[%s363 + $0xa8] sm:$0xf]
        %v482 = vld [vmem:[%s363 + $0xac] sm:$0xf]
        %v483 = vld [vmem:[%s363 + $0xb0] sm:$0xf]
        %v484 = vld [vmem:[%s363 + $0xb4] sm:$0xf]
        %v485 = vld [vmem:[%s363 + $0xb8] sm:$0xf]
        %v486 = vld [vmem:[%s363 + $0xbc] sm:$0xf]
        %v487 = vld [vmem:[%s363 + $0xc0] sm:$0xf]
        %v488 = vld [vmem:[%s363 + $0xc4] sm:$0xf]
        %v489 = vld [vmem:[%s363 + $0xc8] sm:$0xf]
        %v490 = vld [vmem:[%s363 + $0xcc] sm:$0xf]
        %v491 = vld [vmem:[%s363 + $0xd0] sm:$0xf]
        %v492 = vld [vmem:[%s363 + $0xd4] sm:$0xf]
        %v493 = vld [vmem:[%s363 + $0xd8] sm:$0xf]
        %v494 = vld [vmem:[%s363 + $0xdc] sm:$0xf]
        %v495 = vld [vmem:[%s363 + $0xe0] sm:$0xf]
        %v496 = vld [vmem:[%s363 + $0xe4] sm:$0xf]
        %v497 = vld [vmem:[%s363 + $0xe8] sm:$0xf]
        %v498 = vld [vmem:[%s363 + $0xec] sm:$0xf]
        %v499 = vld [vmem:[%s363 + $0xf0] sm:$0xf]
        %v500 = vld [vmem:[%s363 + $0xf4] sm:$0xf]
        %v501 = vld [vmem:[%s363 + $0xf8] sm:$0xf]
        %v502 = vld [vmem:[%s363 + $0xfc] sm:$0xf]
        %v503 = vld [vmem:[%s363 + $0x100] sm:$0xf]
        %v504 = vld [vmem:[%s363 + $0x104] sm:$0xf]
        %v505 = vld [vmem:[%s363 + $0x108] sm:$0xf]
        %v506 = vld [vmem:[%s363 + $0x10c] sm:$0xf]
        %v507 = vld [vmem:[%s363 + $0x110] sm:$0xf]
        %v508 = vld [vmem:[%s363 + $0x114] sm:$0xf]
        %v509 = vld [vmem:[%s363 + $0x118] sm:$0xf]
        %v510 = vld [vmem:[%s363 + $0x11c] sm:$0xf]
        %v511 = vld [vmem:[%s363 + $0x120] sm:$0xf]
        %v512 = vld [vmem:[%s363 + $0x124] sm:$0xf]
        %v513 = vld [vmem:[%s363 + $0x128] sm:$0xf]
        %v514 = vld [vmem:[%s363 + $0x12c] sm:$0xf]
        %v515 = vld [vmem:[%s363 + $0x130] sm:$0xf]
        %v516 = vld [vmem:[%s363 + $0x134] sm:$0xf]
        %v517 = vld [vmem:[%s363 + $0x138] sm:$0xf]
        %v518 = vld [vmem:[%s363 + $0x13c] sm:$0xf]
        %v519 = vld [vmem:[%s363 + $0x140] sm:$0xf]
        %v520 = vld [vmem:[%s363 + $0x144] sm:$0xf]
        %v521 = vld [vmem:[%s363 + $0x148] sm:$0xf]
        %v522 = vld [vmem:[%s363 + $0x14c] sm:$0xf]
        %v523 = vld [vmem:[%s363 + $0x150] sm:$0xf]
        %v524 = vld [vmem:[%s363 + $0x154] sm:$0xf]
        %v525 = vld [vmem:[%s363 + $0x158] sm:$0xf]
        %v526 = vld [vmem:[%s363 + $0x15c] sm:$0xf]
        %v527 = vld [vmem:[%s363 + $0x160] sm:$0xf]
        %v528 = vld [vmem:[%s363 + $0x164] sm:$0xf]
        %v529 = vld [vmem:[%s363 + $0x168] sm:$0xf]
        %v530 = vld [vmem:[%s363 + $0x16c] sm:$0xf]
        %v531 = vld [vmem:[%s363 + $0x170] sm:$0xf]
        %v532 = vld [vmem:[%s363 + $0x174] sm:$0xf]
        %v533 = vld [vmem:[%s363 + $0x178] sm:$0xf]
        %v534 = vld [vmem:[%s363 + $0x17c] sm:$0xf]
        %v535 = vld [vmem:[%s363 + $0x180] sm:$0xf]
        %v536 = vld [vmem:[%s363 + $0x184] sm:$0xf]
        %v537 = vld [vmem:[%s363 + $0x188] sm:$0xf]
        %v538 = vld [vmem:[%s363 + $0x18c] sm:$0xf]
        %v539 = vld [vmem:[%s363 + $0x190] sm:$0xf]
        %v540 = vld [vmem:[%s363 + $0x194] sm:$0xf]
        %v541 = vld [vmem:[%s363 + $0x198] sm:$0xf]
        %v542 = vld [vmem:[%s363 + $0x19c] sm:$0xf]
        %v543 = vld [vmem:[%s363 + $0x1a0] sm:$0xf]
        %v544 = vld [vmem:[%s363 + $0x1a4] sm:$0xf]
        %v545 = vld [vmem:[%s363 + $0x1a8] sm:$0xf]
        %v546 = vld [vmem:[%s363 + $0x1ac] sm:$0xf]
        %v547 = vld [vmem:[%s363 + $0x1b0] sm:$0xf]
        %v548 = vld [vmem:[%s363 + $0x1b4] sm:$0xf]
        %v549 = vld [vmem:[%s363 + $0x1b8] sm:$0xf]
        %v550 = vld [vmem:[%s363 + $0x1bc] sm:$0xf]
        %v551 = vld [vmem:[%s363 + $0x1c0] sm:$0xf]
        %v552 = vld [vmem:[%s363 + $0x1c4] sm:$0xf]
        %v553 = vld [vmem:[%s363 + $0x1c8] sm:$0xf]
        %v554 = vld [vmem:[%s363 + $0x1cc] sm:$0xf]
        %v555 = vld [vmem:[%s363 + $0x1d0] sm:$0xf]
        %v556 = vld [vmem:[%s363 + $0x1d4] sm:$0xf]
        %v557 = vld [vmem:[%s363 + $0x1d8] sm:$0xf]
        %v558 = vld [vmem:[%s363 + $0x1dc] sm:$0xf]
        %v559 = vld [vmem:[%s363 + $0x1e0] sm:$0xf]
        %v560 = vld [vmem:[%s363 + $0x1e4] sm:$0xf]
        %v561 = vld [vmem:[%s363 + $0x1e8] sm:$0xf]
        %v562 = vld [vmem:[%s363 + $0x1ec] sm:$0xf]
        %v563 = vld [vmem:[%s363 + $0x1f0] sm:$0xf]
        %v564 = vld [vmem:[%s363 + $0x1f4] sm:$0xf]
        %v565 = vld [vmem:[%s363 + $0x1f8] sm:$0xf]
        %v566 = vld [vmem:[%s363 + $0x1fc] sm:$0xf]
        %v567 = vld [vmem:[#allocation2] sm:$0x1]
        %v568 = vld [vmem:[#allocation2 + $0x1] sm:$0x1]
        %v569 = vld [vmem:[#allocation2 + $0x2] sm:$0x1]
        %v570 = vld [vmem:[#allocation2 + $0x3] sm:$0x1]
        %v571 = vld [vmem:[#allocation2 + $0x4] sm:$0x1]
        %v572 = vld [vmem:[#allocation2 + $0x5] sm:$0x1]
        %v573 = vld [vmem:[#allocation2 + $0x6] sm:$0x1]
        %v574 = vld [vmem:[#allocation2 + $0x7] sm:$0x1]
        %v591 = vunpack.c.l.b16 %v439
        %v592 = vunpack.c.l.b16 %v440
        %v593 = vunpack.c.l.b16 %v441
        %v594 = vunpack.c.l.b16 %v442
        %v595 = vunpack.c.l.b16 %v443
        %v596 = vunpack.c.l.b16 %v444
        %v597 = vunpack.c.l.b16 %v445
        %v598 = vunpack.c.l.b16 %v446
        %v599 = vunpack.c.l.b16 %v447
        %v600 = vunpack.c.l.b16 %v448
        %v601 = vunpack.c.l.b16 %v449
        %v602 = vunpack.c.l.b16 %v450
        %v603 = vunpack.c.l.b16 %v451
        %v604 = vunpack.c.l.b16 %v452
        %v605 = vunpack.c.l.b16 %v453
        %v606 = vunpack.c.l.b16 %v454
        %v607 = vpack.c.b16 %v592, %v591
        %v608 = vpack.c.b16 %v594, %v593
        %v609 = vpack.c.b16 %v596, %v595
        %v610 = vpack.c.b16 %v598, %v597
        %v611 = vpack.c.b16 %v600, %v599
        %v612 = vpack.c.b16 %v602, %v601
        %v613 = vpack.c.b16 %v604, %v603
        %v614 = vpack.c.b16 %v606, %v605
        %623 = vmatprep.subr.bf16.mxu0 0
        %624 = vmatpush1.bf16.msra.mxu0 %v607
        %625 = vmatprep.subr.bf16.mxu0 0
        %626 = vmatpush1.bf16.msra.mxu0 %v608
        %627 = vmatprep.subr.bf16.mxu0 0
        %628 = vmatpush1.bf16.msra.mxu0 %v609
        %629 = vmatprep.subr.bf16.mxu0 0
        %630 = vmatpush1.bf16.msra.mxu0 %v610
        %631 = vmatprep.subr.bf16.mxu0 0
        %632 = vmatpush1.bf16.msra.mxu0 %v611
        %633 = vmatprep.subr.bf16.mxu0 0
        %634 = vmatpush1.bf16.msra.mxu0 %v612
        %635 = vmatprep.subr.bf16.mxu0 0
        %636 = vmatpush1.bf16.msra.mxu0 %v613
        %637 = vmatprep.subr.bf16.mxu0 0
        %638 = vmatpush1.bf16.msra.mxu0 %v614
        %639 = vmatprep.subr.bf16.mxu0 0
        %640 = vmatpush1.bf16.msra.mxu0 0
        %641 = vmatprep.subr.bf16.mxu0 0
        %642 = vmatpush1.bf16.msra.mxu0 0
        %643 = vmatprep.subr.bf16.mxu0 0
        %644 = vmatpush1.bf16.msra.mxu0 0
        %645 = vmatprep.subr.bf16.mxu0 0
        %646 = vmatpush1.bf16.msra.mxu0 0
        %647 = vmatprep.subr.bf16.mxu0 0
        %648 = vmatpush1.bf16.msra.mxu0 0
        %649 = vmatprep.subr.bf16.mxu0 0
        %650 = vmatpush1.bf16.msra.mxu0 0
        %651 = vmatprep.subr.bf16.mxu0 0
        %652 = vmatpush1.bf16.msra.mxu0 0
        %653 = vmatprep.subr.bf16.mxu0 0
        %654 = vmatpush1.bf16.msra.mxu0 0
        %655 = vmatprep.mubr.bf16.mxu0 0
        %656 = vmatmul.mubr.bf16.gmra.mrb[0].mxu0 %v431
        %v657 = vpop.f32.mrb[0].mxu0
        %v658 = vadd.f32 0.0, %v657
        %v659 = vpop.f32.mrb[0].mxu0
        %v660 = vpop.f32.mrb[0].mxu0
        %v661 = vpop.f32.mrb[0].mxu0
        %662 = vdwg.mxu0
        %v679 = vunpack.c.l.b16 %v455
        %v680 = vunpack.c.l.b16 %v456
        %v681 = vunpack.c.l.b16 %v457
        %v682 = vunpack.c.l.b16 %v458
        %v683 = vunpack.c.l.b16 %v459
        %v684 = vunpack.c.l.b16 %v460
        %v685 = vunpack.c.l.b16 %v461
        %v686 = vunpack.c.l.b16 %v462
        %v687 = vunpack.c.l.b16 %v463
        %v688 = vunpack.c.l.b16 %v464
        %v689 = vunpack.c.l.b16 %v465
        %v690 = vunpack.c.l.b16 %v466
        %v691 = vunpack.c.l.b16 %v467
        %v692 = vunpack.c.l.b16 %v468
        %v693 = vunpack.c.l.b16 %v469
        %v694 = vunpack.c.l.b16 %v470
        %v695 = vpack.c.b16 %v680, %v679
        %v696 = vpack.c.b16 %v682, %v681
        %v697 = vpack.c.b16 %v684, %v683
        %v698 = vpack.c.b16 %v686, %v685
        %v699 = vpack.c.b16 %v688, %v687
        %v700 = vpack.c.b16 %v690, %v689
        %v701 = vpack.c.b16 %v692, %v691
        %v702 = vpack.c.b16 %v694, %v693
        %711 = vmatprep.subr.bf16.mxu0 0
        %712 = vmatpush1.bf16.msra.mxu0 %v695
        %713 = vmatprep.subr.bf16.mxu0 0
        %714 = vmatpush1.bf16.msra.mxu0 %v696
        %715 = vmatprep.subr.bf16.mxu0 0
        %716 = vmatpush1.bf16.msra.mxu0 %v697
        %717 = vmatprep.subr.bf16.mxu0 0
        %718 = vmatpush1.bf16.msra.mxu0 %v698
        %719 = vmatprep.subr.bf16.mxu0 0
        %720 = vmatpush1.bf16.msra.mxu0 %v699
        %721 = vmatprep.subr.bf16.mxu0 0
        %722 = vmatpush1.bf16.msra.mxu0 %v700
        %723 = vmatprep.subr.bf16.mxu0 0
        %724 = vmatpush1.bf16.msra.mxu0 %v701
        %725 = vmatprep.subr.bf16.mxu0 0
        %726 = vmatpush1.bf16.msra.mxu0 %v702
        %727 = vmatprep.subr.bf16.mxu0 0
        %728 = vmatpush1.bf16.msra.mxu0 0
        %729 = vmatprep.subr.bf16.mxu0 0
        %730 = vmatpush1.bf16.msra.mxu0 0
        %731 = vmatprep.subr.bf16.mxu0 0
        %732 = vmatpush1.bf16.msra.mxu0 0
        %733 = vmatprep.subr.bf16.mxu0 0
        %734 = vmatpush1.bf16.msra.mxu0 0
        %735 = vmatprep.subr.bf16.mxu0 0
        %736 = vmatpush1.bf16.msra.mxu0 0
        %737 = vmatprep.subr.bf16.mxu0 0
        %738 = vmatpush1.bf16.msra.mxu0 0
        %739 = vmatprep.subr.bf16.mxu0 0
        %740 = vmatpush1.bf16.msra.mxu0 0
        %741 = vmatprep.subr.bf16.mxu0 0
        %742 = vmatpush1.bf16.msra.mxu0 0
        %743 = vmatprep.mubr.bf16.mxu0 0
        %744 = vmatmul.mubr.bf16.gmra.mrb[0].mxu0 %v432
        %v745 = vpop.f32.mrb[0].mxu0
        %v746 = vadd.f32 0.0, %v745
        %v747 = vpop.f32.mrb[0].mxu0
        %v748 = vpop.f32.mrb[0].mxu0
        %v749 = vpop.f32.mrb[0].mxu0
        %750 = vdwg.mxu0
        %v767 = vunpack.c.l.b16 %v471
        %v768 = vunpack.c.l.b16 %v472
        %v769 = vunpack.c.l.b16 %v473
        %v770 = vunpack.c.l.b16 %v474
        %v771 = vunpack.c.l.b16 %v475
        %v772 = vunpack.c.l.b16 %v476
        %v773 = vunpack.c.l.b16 %v477
        %v774 = vunpack.c.l.b16 %v478
        %v775 = vunpack.c.l.b16 %v479
        %v776 = vunpack.c.l.b16 %v480
        %v777 = vunpack.c.l.b16 %v481
        %v778 = vunpack.c.l.b16 %v482
        %v779 = vunpack.c.l.b16 %v483
        %v780 = vunpack.c.l.b16 %v484
        %v781 = vunpack.c.l.b16 %v485
        %v782 = vunpack.c.l.b16 %v486
        %v783 = vpack.c.b16 %v768, %v767
        %v784 = vpack.c.b16 %v770, %v769
        %v785 = vpack.c.b16 %v772, %v771
        %v786 = vpack.c.b16 %v774, %v773
        %v787 = vpack.c.b16 %v776, %v775
        %v788 = vpack.c.b16 %v778, %v777
        %v789 = vpack.c.b16 %v780, %v779
        %v790 = vpack.c.b16 %v782, %v781
        %799 = vmatprep.subr.bf16.mxu0 0
        %800 = vmatpush1.bf16.msra.mxu0 %v783
        %801 = vmatprep.subr.bf16.mxu0 0
        %802 = vmatpush1.bf16.msra.mxu0 %v784
        %803 = vmatprep.subr.bf16.mxu0 0
        %804 = vmatpush1.bf16.msra.mxu0 %v785
        %805 = vmatprep.subr.bf16.mxu0 0
        %806 = vmatpush1.bf16.msra.mxu0 %v786
        %807 = vmatprep.subr.bf16.mxu0 0
        %808 = vmatpush1.bf16.msra.mxu0 %v787
        %809 = vmatprep.subr.bf16.mxu0 0
        %810 = vmatpush1.bf16.msra.mxu0 %v788
        %811 = vmatprep.subr.bf16.mxu0 0
        %812 = vmatpush1.bf16.msra.mxu0 %v789
        %813 = vmatprep.subr.bf16.mxu0 0
        %814 = vmatpush1.bf16.msra.mxu0 %v790
        %815 = vmatprep.subr.bf16.mxu0 0
        %816 = vmatpush1.bf16.msra.mxu0 0
        %817 = vmatprep.subr.bf16.mxu0 0
        %818 = vmatpush1.bf16.msra.mxu0 0
        %819 = vmatprep.subr.bf16.mxu0 0
        %820 = vmatpush1.bf16.msra.mxu0 0
        %821 = vmatprep.subr.bf16.mxu0 0
        %822 = vmatpush1.bf16.msra.mxu0 0
        %823 = vmatprep.subr.bf16.mxu0 0
        %824 = vmatpush1.bf16.msra.mxu0 0
        %825 = vmatprep.subr.bf16.mxu0 0
        %826 = vmatpush1.bf16.msra.mxu0 0
        %827 = vmatprep.subr.bf16.mxu0 0
        %828 = vmatpush1.bf16.msra.mxu0 0
        %829 = vmatprep.subr.bf16.mxu0 0
        %830 = vmatpush1.bf16.msra.mxu0 0
        %831 = vmatprep.mubr.bf16.mxu0 0
        %832 = vmatmul.mubr.bf16.gmra.mrb[0].mxu0 %v433
        %v833 = vpop.f32.mrb[0].mxu0
        %v834 = vadd.f32 0.0, %v833
        %v835 = vpop.f32.mrb[0].mxu0
        %v836 = vpop.f32.mrb[0].mxu0
        %v837 = vpop.f32.mrb[0].mxu0
        %838 = vdwg.mxu0
        %v855 = vunpack.c.l.b16 %v487
        %v856 = vunpack.c.l.b16 %v488
        %v857 = vunpack.c.l.b16 %v489
        %v858 = vunpack.c.l.b16 %v490
        %v859 = vunpack.c.l.b16 %v491
        %v860 = vunpack.c.l.b16 %v492
        %v861 = vunpack.c.l.b16 %v493
        %v862 = vunpack.c.l.b16 %v494
        %v863 = vunpack.c.l.b16 %v495
        %v864 = vunpack.c.l.b16 %v496
        %v865 = vunpack.c.l.b16 %v497
        %v866 = vunpack.c.l.b16 %v498
        %v867 = vunpack.c.l.b16 %v499
        %v868 = vunpack.c.l.b16 %v500
        %v869 = vunpack.c.l.b16 %v501
        %v870 = vunpack.c.l.b16 %v502
        %v871 = vpack.c.b16 %v856, %v855
        %v872 = vpack.c.b16 %v858, %v857
        %v873 = vpack.c.b16 %v860, %v859
        %v874 = vpack.c.b16 %v862, %v861
        %v875 = vpack.c.b16 %v864, %v863
        %v876 = vpack.c.b16 %v866, %v865
        %v877 = vpack.c.b16 %v868, %v867
        %v878 = vpack.c.b16 %v870, %v869
        %887 = vmatprep.subr.bf16.mxu0 0
        %888 = vmatpush1.bf16.msra.mxu0 %v871
        %889 = vmatprep.subr.bf16.mxu0 0
        %890 = vmatpush1.bf16.msra.mxu0 %v872
        %891 = vmatprep.subr.bf16.mxu0 0
        %892 = vmatpush1.bf16.msra.mxu0 %v873
        %893 = vmatprep.subr.bf16.mxu0 0
        %894 = vmatpush1.bf16.msra.mxu0 %v874
        %895 = vmatprep.subr.bf16.mxu0 0
        %896 = vmatpush1.bf16.msra.mxu0 %v875
        %897 = vmatprep.subr.bf16.mxu0 0
        %898 = vmatpush1.bf16.msra.mxu0 %v876
        %899 = vmatprep.subr.bf16.mxu0 0
        %900 = vmatpush1.bf16.msra.mxu0 %v877
        %901 = vmatprep.subr.bf16.mxu0 0
        %902 = vmatpush1.bf16.msra.mxu0 %v878
        %903 = vmatprep.subr.bf16.mxu0 0
        %904 = vmatpush1.bf16.msra.mxu0 0
        %905 = vmatprep.subr.bf16.mxu0 0
        %906 = vmatpush1.bf16.msra.mxu0 0
        %907 = vmatprep.subr.bf16.mxu0 0
        %908 = vmatpush1.bf16.msra.mxu0 0
        %909 = vmatprep.subr.bf16.mxu0 0
        %910 = vmatpush1.bf16.msra.mxu0 0
        %911 = vmatprep.subr.bf16.mxu0 0
        %912 = vmatpush1.bf16.msra.mxu0 0
        %913 = vmatprep.subr.bf16.mxu0 0
        %914 = vmatpush1.bf16.msra.mxu0 0
        %915 = vmatprep.subr.bf16.mxu0 0
        %916 = vmatpush1.bf16.msra.mxu0 0
        %917 = vmatprep.subr.bf16.mxu0 0
        %918 = vmatpush1.bf16.msra.mxu0 0
        %919 = vmatprep.mubr.bf16.mxu0 0
        %920 = vmatmul.mubr.bf16.gmra.mrb[0].mxu0 %v434
        %v921 = vpop.f32.mrb[0].mxu0
        %v922 = vadd.f32 0.0, %v921
        %v923 = vpop.f32.mrb[0].mxu0
        %v924 = vpop.f32.mrb[0].mxu0
        %v925 = vpop.f32.mrb[0].mxu0
        %926 = vdwg.mxu0
        %v943 = vunpack.c.l.b16 %v503
        %v944 = vunpack.c.l.b16 %v504
        %v945 = vunpack.c.l.b16 %v505
        %v946 = vunpack.c.l.b16 %v506
        %v947 = vunpack.c.l.b16 %v507
        %v948 = vunpack.c.l.b16 %v508
        %v949 = vunpack.c.l.b16 %v509
        %v950 = vunpack.c.l.b16 %v510
        %v951 = vunpack.c.l.b16 %v511
        %v952 = vunpack.c.l.b16 %v512
        %v953 = vunpack.c.l.b16 %v513
        %v954 = vunpack.c.l.b16 %v514
        %v955 = vunpack.c.l.b16 %v515
        %v956 = vunpack.c.l.b16 %v516
        %v957 = vunpack.c.l.b16 %v517
        %v958 = vunpack.c.l.b16 %v518
        %v959 = vpack.c.b16 %v944, %v943
        %v960 = vpack.c.b16 %v946, %v945
        %v961 = vpack.c.b16 %v948, %v947
        %v962 = vpack.c.b16 %v950, %v949
        %v963 = vpack.c.b16 %v952, %v951
        %v964 = vpack.c.b16 %v954, %v953
        %v965 = vpack.c.b16 %v956, %v955
        %v966 = vpack.c.b16 %v958, %v957
        %975 = vmatprep.subr.bf16.mxu0 0
        %976 = vmatpush1.bf16.msra.mxu0 %v959
        %977 = vmatprep.subr.bf16.mxu0 0
        %978 = vmatpush1.bf16.msra.mxu0 %v960
        %979 = vmatprep.subr.bf16.mxu0 0
        %980 = vmatpush1.bf16.msra.mxu0 %v961
        %981 = vmatprep.subr.bf16.mxu0 0
        %982 = vmatpush1.bf16.msra.mxu0 %v962
        %983 = vmatprep.subr.bf16.mxu0 0
        %984 = vmatpush1.bf16.msra.mxu0 %v963
        %985 = vmatprep.subr.bf16.mxu0 0
        %986 = vmatpush1.bf16.msra.mxu0 %v964
        %987 = vmatprep.subr.bf16.mxu0 0
        %988 = vmatpush1.bf16.msra.mxu0 %v965
        %989 = vmatprep.subr.bf16.mxu0 0
        %990 = vmatpush1.bf16.msra.mxu0 %v966
        %991 = vmatprep.subr.bf16.mxu0 0
        %992 = vmatpush1.bf16.msra.mxu0 0
        %993 = vmatprep.subr.bf16.mxu0 0
        %994 = vmatpush1.bf16.msra.mxu0 0
        %995 = vmatprep.subr.bf16.mxu0 0
        %996 = vmatpush1.bf16.msra.mxu0 0
        %997 = vmatprep.subr.bf16.mxu0 0
        %998 = vmatpush1.bf16.msra.mxu0 0
        %999 = vmatprep.subr.bf16.mxu0 0
        %1000 = vmatpush1.bf16.msra.mxu0 0
        %1001 = vmatprep.subr.bf16.mxu0 0
        %1002 = vmatpush1.bf16.msra.mxu0 0
        %1003 = vmatprep.subr.bf16.mxu0 0
        %1004 = vmatpush1.bf16.msra.mxu0 0
        %1005 = vmatprep.subr.bf16.mxu0 0
        %1006 = vmatpush1.bf16.msra.mxu0 0
        %1007 = vmatprep.mubr.bf16.mxu0 0
        %1008 = vmatmul.mubr.bf16.gmra.mrb[0].mxu0 %v435
        %v1009 = vpop.f32.mrb[0].mxu0
        %v1010 = vadd.f32 0.0, %v1009
        %v1011 = vpop.f32.mrb[0].mxu0
        %v1012 = vpop.f32.mrb[0].mxu0
        %v1013 = vpop.f32.mrb[0].mxu0
        %1014 = vdwg.mxu0
        %v1031 = vunpack.c.l.b16 %v519
        %v1032 = vunpack.c.l.b16 %v520
        %v1033 = vunpack.c.l.b16 %v521
        %v1034 = vunpack.c.l.b16 %v522
        %v1035 = vunpack.c.l.b16 %v523
        %v1036 = vunpack.c.l.b16 %v524
        %v1037 = vunpack.c.l.b16 %v525
        %v1038 = vunpack.c.l.b16 %v526
        %v1039 = vunpack.c.l.b16 %v527
        %v1040 = vunpack.c.l.b16 %v528
        %v1041 = vunpack.c.l.b16 %v529
        %v1042 = vunpack.c.l.b16 %v530
        %v1043 = vunpack.c.l.b16 %v531
        %v1044 = vunpack.c.l.b16 %v532
        %v1045 = vunpack.c.l.b16 %v533
        %v1046 = vunpack.c.l.b16 %v534
        %v1047 = vpack.c.b16 %v1032, %v1031
        %v1048 = vpack.c.b16 %v1034, %v1033
        %v1049 = vpack.c.b16 %v1036, %v1035
        %v1050 = vpack.c.b16 %v1038, %v1037
        %v1051 = vpack.c.b16 %v1040, %v1039
        %v1052 = vpack.c.b16 %v1042, %v1041
        %v1053 = vpack.c.b16 %v1044, %v1043
        %v1054 = vpack.c.b16 %v1046, %v1045
        %1063 = vmatprep.subr.bf16.mxu0 0
        %1064 = vmatpush1.bf16.msra.mxu0 %v1047
        %1065 = vmatprep.subr.bf16.mxu0 0
        %1066 = vmatpush1.bf16.msra.mxu0 %v1048
        %1067 = vmatprep.subr.bf16.mxu0 0
        %1068 = vmatpush1.bf16.msra.mxu0 %v1049
        %1069 = vmatprep.subr.bf16.mxu0 0
        %1070 = vmatpush1.bf16.msra.mxu0 %v1050
        %1071 = vmatprep.subr.bf16.mxu0 0
        %1072 = vmatpush1.bf16.msra.mxu0 %v1051
        %1073 = vmatprep.subr.bf16.mxu0 0
        %1074 = vmatpush1.bf16.msra.mxu0 %v1052
        %1075 = vmatprep.subr.bf16.mxu0 0
        %1076 = vmatpush1.bf16.msra.mxu0 %v1053
        %1077 = vmatprep.subr.bf16.mxu0 0
        %1078 = vmatpush1.bf16.msra.mxu0 %v1054
        %1079 = vmatprep.subr.bf16.mxu0 0
        %1080 = vmatpush1.bf16.msra.mxu0 0
        %1081 = vmatprep.subr.bf16.mxu0 0
        %1082 = vmatpush1.bf16.msra.mxu0 0
        %1083 = vmatprep.subr.bf16.mxu0 0
        %1084 = vmatpush1.bf16.msra.mxu0 0
        %1085 = vmatprep.subr.bf16.mxu0 0
        %1086 = vmatpush1.bf16.msra.mxu0 0
        %1087 = vmatprep.subr.bf16.mxu0 0
        %1088 = vmatpush1.bf16.msra.mxu0 0
        %1089 = vmatprep.subr.bf16.mxu0 0
        %1090 = vmatpush1.bf16.msra.mxu0 0
        %1091 = vmatprep.subr.bf16.mxu0 0
        %1092 = vmatpush1.bf16.msra.mxu0 0
        %1093 = vmatprep.subr.bf16.mxu0 0
        %1094 = vmatpush1.bf16.msra.mxu0 0
        %1095 = vmatprep.mubr.bf16.mxu0 0
        %1096 = vmatmul.mubr.bf16.gmra.mrb[0].mxu0 %v436
        %v1097 = vpop.f32.mrb[0].mxu0
        %v1098 = vadd.f32 0.0, %v1097
        %v1099 = vpop.f32.mrb[0].mxu0
        %v1100 = vpop.f32.mrb[0].mxu0
        %v1101 = vpop.f32.mrb[0].mxu0
        %1102 = vdwg.mxu0
        %v1119 = vunpack.c.l.b16 %v535
        %v1120 = vunpack.c.l.b16 %v536
        %v1121 = vunpack.c.l.b16 %v537
        %v1122 = vunpack.c.l.b16 %v538
        %v1123 = vunpack.c.l.b16 %v539
        %v1124 = vunpack.c.l.b16 %v540
        %v1125 = vunpack.c.l.b16 %v541
        %v1126 = vunpack.c.l.b16 %v542
        %v1127 = vunpack.c.l.b16 %v543
        %v1128 = vunpack.c.l.b16 %v544
        %v1129 = vunpack.c.l.b16 %v545
        %v1130 = vunpack.c.l.b16 %v546
        %v1131 = vunpack.c.l.b16 %v547
        %v1132 = vunpack.c.l.b16 %v548
        %v1133 = vunpack.c.l.b16 %v549
        %v1134 = vunpack.c.l.b16 %v550
        %v1135 = vpack.c.b16 %v1120, %v1119
        %v1136 = vpack.c.b16 %v1122, %v1121
        %v1137 = vpack.c.b16 %v1124, %v1123
        %v1138 = vpack.c.b16 %v1126, %v1125
        %v1139 = vpack.c.b16 %v1128, %v1127
        %v1140 = vpack.c.b16 %v1130, %v1129
        %v1141 = vpack.c.b16 %v1132, %v1131
        %v1142 = vpack.c.b16 %v1134, %v1133
        %1151 = vmatprep.subr.bf16.mxu0 0
        %1152 = vmatpush1.bf16.msra.mxu0 %v1135
        %1153 = vmatprep.subr.bf16.mxu0 0
        %1154 = vmatpush1.bf16.msra.mxu0 %v1136
        %1155 = vmatprep.subr.bf16.mxu0 0
        %1156 = vmatpush1.bf16.msra.mxu0 %v1137
        %1157 = vmatprep.subr.bf16.mxu0 0
        %1158 = vmatpush1.bf16.msra.mxu0 %v1138
        %1159 = vmatprep.subr.bf16.mxu0 0
        %1160 = vmatpush1.bf16.msra.mxu0 %v1139
        %1161 = vmatprep.subr.bf16.mxu0 0
        %1162 = vmatpush1.bf16.msra.mxu0 %v1140
        %1163 = vmatprep.subr.bf16.mxu0 0
        %1164 = vmatpush1.bf16.msra.mxu0 %v1141
        %1165 = vmatprep.subr.bf16.mxu0 0
        %1166 = vmatpush1.bf16.msra.mxu0 %v1142
        %1167 = vmatprep.subr.bf16.mxu0 0
        %1168 = vmatpush1.bf16.msra.mxu0 0
        %1169 = vmatprep.subr.bf16.mxu0 0
        %1170 = vmatpush1.bf16.msra.mxu0 0
        %1171 = vmatprep.subr.bf16.mxu0 0
        %1172 = vmatpush1.bf16.msra.mxu0 0
        %1173 = vmatprep.subr.bf16.mxu0 0
        %1174 = vmatpush1.bf16.msra.mxu0 0
        %1175 = vmatprep.subr.bf16.mxu0 0
        %1176 = vmatpush1.bf16.msra.mxu0 0
        %1177 = vmatprep.subr.bf16.mxu0 0
        %1178 = vmatpush1.bf16.msra.mxu0 0
        %1179 = vmatprep.subr.bf16.mxu0 0
        %1180 = vmatpush1.bf16.msra.mxu0 0
        %1181 = vmatprep.subr.bf16.mxu0 0
        %1182 = vmatpush1.bf16.msra.mxu0 0
        %1183 = vmatprep.mubr.bf16.mxu0 0
        %1184 = vmatmul.mubr.bf16.gmra.mrb[0].mxu0 %v437
        %v1185 = vpop.f32.mrb[0].mxu0
        %v1186 = vadd.f32 0.0, %v1185
        %v1187 = vpop.f32.mrb[0].mxu0
        %v1188 = vpop.f32.mrb[0].mxu0
        %v1189 = vpop.f32.mrb[0].mxu0
        %1190 = vdwg.mxu0
        %v1207 = vunpack.c.l.b16 %v551
        %v1208 = vunpack.c.l.b16 %v552
        %v1209 = vunpack.c.l.b16 %v553
        %v1210 = vunpack.c.l.b16 %v554
        %v1211 = vunpack.c.l.b16 %v555
        %v1212 = vunpack.c.l.b16 %v556
        %v1213 = vunpack.c.l.b16 %v557
        %v1214 = vunpack.c.l.b16 %v558
        %v1215 = vunpack.c.l.b16 %v559
        %v1216 = vunpack.c.l.b16 %v560
        %v1217 = vunpack.c.l.b16 %v561
        %v1218 = vunpack.c.l.b16 %v562
        %v1219 = vunpack.c.l.b16 %v563
        %v1220 = vunpack.c.l.b16 %v564
        %v1221 = vunpack.c.l.b16 %v565
        %v1222 = vunpack.c.l.b16 %v566
        %v1223 = vpack.c.b16 %v1208, %v1207
        %v1224 = vpack.c.b16 %v1210, %v1209
        %v1225 = vpack.c.b16 %v1212, %v1211
        %v1226 = vpack.c.b16 %v1214, %v1213
        %v1227 = vpack.c.b16 %v1216, %v1215
        %v1228 = vpack.c.b16 %v1218, %v1217
        %v1229 = vpack.c.b16 %v1220, %v1219
        %v1230 = vpack.c.b16 %v1222, %v1221
        %1239 = vmatprep.subr.bf16.mxu0 0
        %1240 = vmatpush1.bf16.msra.mxu0 %v1223
        %1241 = vmatprep.subr.bf16.mxu0 0
        %1242 = vmatpush1.bf16.msra.mxu0 %v1224
        %1243 = vmatprep.subr.bf16.mxu0 0
        %1244 = vmatpush1.bf16.msra.mxu0 %v1225
        %1245 = vmatprep.subr.bf16.mxu0 0
        %1246 = vmatpush1.bf16.msra.mxu0 %v1226
        %1247 = vmatprep.subr.bf16.mxu0 0
        %1248 = vmatpush1.bf16.msra.mxu0 %v1227
        %1249 = vmatprep.subr.bf16.mxu0 0
        %1250 = vmatpush1.bf16.msra.mxu0 %v1228
        %1251 = vmatprep.subr.bf16.mxu0 0
        %1252 = vmatpush1.bf16.msra.mxu0 %v1229
        %1253 = vmatprep.subr.bf16.mxu0 0
        %1254 = vmatpush1.bf16.msra.mxu0 %v1230
        %1255 = vmatprep.subr.bf16.mxu0 0
        %1256 = vmatpush1.bf16.msra.mxu0 0
        %1257 = vmatprep.subr.bf16.mxu0 0
        %1258 = vmatpush1.bf16.msra.mxu0 0
        %1259 = vmatprep.subr.bf16.mxu0 0
        %1260 = vmatpush1.bf16.msra.mxu0 0
        %1261 = vmatprep.subr.bf16.mxu0 0
        %1262 = vmatpush1.bf16.msra.mxu0 0
        %1263 = vmatprep.subr.bf16.mxu0 0
        %1264 = vmatpush1.bf16.msra.mxu0 0
        %1265 = vmatprep.subr.bf16.mxu0 0
        %1266 = vmatpush1.bf16.msra.mxu0 0
        %1267 = vmatprep.subr.bf16.mxu0 0
        %1268 = vmatpush1.bf16.msra.mxu0 0
        %1269 = vmatprep.subr.bf16.mxu0 0
        %1270 = vmatpush1.bf16.msra.mxu0 0
        %1271 = vmatprep.mubr.bf16.mxu0 0
        %1272 = vmatmul.mubr.bf16.gmra.mrb[0].mxu0 %v438
        %v1273 = vpop.f32.mrb[0].mxu0
        %v1274 = vadd.f32 0.0, %v1273
        %v1275 = vpop.f32.mrb[0].mxu0
        %v1276 = vpop.f32.mrb[0].mxu0
        %v1277 = vpop.f32.mrb[0].mxu0
        %1278 = vdwg.mxu0
        %v1279 = vadd.f32 %v567, %v658
        %v1280 = vadd.f32 %v568, %v746
        %v1281 = vadd.f32 %v569, %v834
        %v1282 = vadd.f32 %v570, %v922
        %v1283 = vadd.f32 %v571, %v1010
        %v1284 = vadd.f32 %v572, %v1098
        %v1285 = vadd.f32 %v573, %v1186
        %v1286 = vadd.f32 %v574, %v1274
        %1287 = vst [vmem:[#allocation2] sm:$0x1] %v1279
        %1288 = vst [vmem:[#allocation2 + $0x1] sm:$0x1] %v1280
        %1289 = vst [vmem:[#allocation2 + $0x2] sm:$0x1] %v1281
        %1290 = vst [vmem:[#allocation2 + $0x3] sm:$0x1] %v1282
        %1291 = vst [vmem:[#allocation2 + $0x4] sm:$0x1] %v1283
        %1292 = vst [vmem:[#allocation2 + $0x5] sm:$0x1] %v1284
        %1293 = vst [vmem:[#allocation2 + $0x6] sm:$0x1] %v1285
        %1294 = vst [vmem:[#allocation2 + $0x7] sm:$0x1] %v1286
        %v1295 = vld [vmem:[#allocation3] sm:$0x1]
        %v1296 = vld [vmem:[#allocation3 + $0x1] sm:$0x1]
        %v1297 = vld [vmem:[#allocation3 + $0x2] sm:$0x1]
        %v1298 = vld [vmem:[#allocation3 + $0x3] sm:$0x1]
        %v1299 = vld [vmem:[#allocation3 + $0x4] sm:$0x1]
        %v1300 = vld [vmem:[#allocation3 + $0x5] sm:$0x1]
        %v1301 = vld [vmem:[#allocation3 + $0x6] sm:$0x1]
        %v1302 = vld [vmem:[#allocation3 + $0x7] sm:$0x1]
        %v1303 = vunpack.c.l.bf16 %v431
        %v1304 = vunpack.c.l.bf16 %v432
        %v1305 = vunpack.c.l.bf16 %v433
        %v1306 = vunpack.c.l.bf16 %v434
        %v1307 = vunpack.c.l.bf16 %v435
        %v1308 = vunpack.c.l.bf16 %v436
        %v1309 = vunpack.c.l.bf16 %v437
        %v1310 = vunpack.c.l.bf16 %v438
        %vm1311 = vcmask 1040384
        %v1312 = vsel %vm1311, %v1303, 0.0
        %1313 = vadd.xlane.f32.xlu0 %v1312
        %v1314 = vpop.xlane.xlu0 %1313
        %v1315 = vsel %vm1311, %v1304, 0.0
        %1316 = vadd.xlane.f32.xlu0 %v1315
        %v1317 = vpop.xlane.xlu0 %1316
        %v1318 = vsel %vm1311, %v1305, 0.0
        %1319 = vadd.xlane.f32.xlu0 %v1318
        %v1320 = vpop.xlane.xlu0 %1319
        %v1321 = vsel %vm1311, %v1306, 0.0
        %1322 = vadd.xlane.f32.xlu0 %v1321
        %v1323 = vpop.xlane.xlu0 %1322
        %v1324 = vsel %vm1311, %v1307, 0.0
        %1325 = vadd.xlane.f32.xlu0 %v1324
        %v1326 = vpop.xlane.xlu0 %1325
        %v1327 = vsel %vm1311, %v1308, 0.0
        %1328 = vadd.xlane.f32.xlu0 %v1327
        %v1329 = vpop.xlane.xlu0 %1328
        %v1330 = vsel %vm1311, %v1309, 0.0
        %1331 = vadd.xlane.f32.xlu0 %v1330
        %v1332 = vpop.xlane.xlu0 %1331
        %v1333 = vsel %vm1311, %v1310, 0.0
        %1334 = vadd.xlane.f32.xlu0 %v1333
        %v1335 = vpop.xlane.xlu0 %1334
        %v1336 = vadd.f32 %v1295, %v1314
        %v1337 = vadd.f32 %v1296, %v1317
        %v1338 = vadd.f32 %v1297, %v1320
        %v1339 = vadd.f32 %v1298, %v1323
        %v1340 = vadd.f32 %v1299, %v1326
        %v1341 = vadd.f32 %v1300, %v1329
        %v1342 = vadd.f32 %v1301, %v1332
        %v1343 = vadd.f32 %v1302, %v1335
        %vm1344 = vcmask 0
        %1345 = vst.msk [vmem:[#allocation3] sm:$0x1] %vm1344, %v1336
        %1346 = vst.msk [vmem:[#allocation3 + $0x1] sm:$0x1] %vm1344, %v1337
        %1347 = vst.msk [vmem:[#allocation3 + $0x2] sm:$0x1] %vm1344, %v1338
        %1348 = vst.msk [vmem:[#allocation3 + $0x3] sm:$0x1] %vm1344, %v1339
        %1349 = vst.msk [vmem:[#allocation3 + $0x4] sm:$0x1] %vm1344, %v1340
        %1350 = vst.msk [vmem:[#allocation3 + $0x5] sm:$0x1] %vm1344, %v1341
        %1351 = vst.msk [vmem:[#allocation3 + $0x6] sm:$0x1] %vm1344, %v1342
        %1352 = vst.msk [vmem:[#allocation3 + $0x7] sm:$0x1] %vm1344, %v1343
        %p1353 = scmp.eq.s32.totalorder %s26, 1
        // Predicated region
        $region94: #{tpu_custom_call.1} parent=80 // pred_check
          %p1354 = pneg %p1353
        $region95: #{tpu_custom_call.1} parent=80 // pred_check_branch
          %1356 = sbr.rel (%p1354) target = $region97
        $region96: #{tpu_custom_call.1} parent=80 // pred_region
          %v1357 = vld [vmem:[#allocation3] sm:$0x1]
          %v1358 = vld [vmem:[#allocation3 + $0x1] sm:$0x1]
          %v1359 = vld [vmem:[#allocation3 + $0x2] sm:$0x1]
          %v1360 = vld [vmem:[#allocation3 + $0x3] sm:$0x1]
          %v1361 = vld [vmem:[#allocation3 + $0x4] sm:$0x1]
          %v1362 = vld [vmem:[#allocation3 + $0x5] sm:$0x1]
          %v1363 = vld [vmem:[#allocation3 + $0x6] sm:$0x1]
          %v1364 = vld [vmem:[#allocation3 + $0x7] sm:$0x1]
          %v1365 = vmax.f32 %v1357, 1.0
          %v1366 = vmax.f32 %v1358, 1.0
          %v1367 = vmax.f32 %v1359, 1.0
          %v1368 = vmax.f32 %v1360, 1.0
          %v1369 = vmax.f32 %v1361, 1.0
          %v1370 = vmax.f32 %v1362, 1.0
          %v1371 = vmax.f32 %v1363, 1.0
          %v1372 = vmax.f32 %v1364, 1.0
          %v1373 = vrcp.pop %v1365
          %v1374 = vrcp.pop %v1366
          %v1375 = vrcp.pop %v1367
          %v1376 = vrcp.pop %v1368
          %v1377 = vrcp.pop %v1369
          %v1378 = vrcp.pop %v1370
          %v1379 = vrcp.pop %v1371
          %v1380 = vrcp.pop %v1372
          %v1381 = vld [vmem:[#allocation2] sm:$0x1]
          %v1382 = vld [vmem:[#allocation2 + $0x1] sm:$0x1]
          %v1383 = vld [vmem:[#allocation2 + $0x2] sm:$0x1]
          %v1384 = vld [vmem:[#allocation2 + $0x3] sm:$0x1]
          %v1385 = vld [vmem:[#allocation2 + $0x4] sm:$0x1]
          %v1386 = vld [vmem:[#allocation2 + $0x5] sm:$0x1]
          %v1387 = vld [vmem:[#allocation2 + $0x6] sm:$0x1]
          %v1388 = vld [vmem:[#allocation2 + $0x7] sm:$0x1]
          %1390 = vset.pattern.permute.xlu0 0
          %1391 = vperm.xlu0 %1390, %v1373
          %v1392 = vpop.permute.xlu0 %1391
          %v1394 = vlaneseq
          %v1395 = vshrl.u32 %v1394, 7
          %v1396 = vsub.s32 0, %v1395
          %v1397 = vrot.slane %v1392, %v1396
          %1399 = vset.pattern.permute.xlu0 0
          %1400 = vperm.xlu0 %1399, %v1374
          %v1401 = vpop.permute.xlu0 %1400
          %v1403 = vlaneseq
          %v1404 = vshrl.u32 %v1403, 7
          %v1405 = vsub.s32 0, %v1404
          %v1406 = vrot.slane %v1401, %v1405
          %1408 = vset.pattern.permute.xlu0 0
          %1409 = vperm.xlu0 %1408, %v1375
          %v1410 = vpop.permute.xlu0 %1409
          %v1412 = vlaneseq
          %v1413 = vshrl.u32 %v1412, 7
          %v1414 = vsub.s32 0, %v1413
          %v1415 = vrot.slane %v1410, %v1414
          %1417 = vset.pattern.permute.xlu0 0
          %1418 = vperm.xlu0 %1417, %v1376
          %v1419 = vpop.permute.xlu0 %1418
          %v1421 = vlaneseq
          %v1422 = vshrl.u32 %v1421, 7
          %v1423 = vsub.s32 0, %v1422
          %v1424 = vrot.slane %v1419, %v1423
          %1426 = vset.pattern.permute.xlu0 0
          %1427 = vperm.xlu0 %1426, %v1377
          %v1428 = vpop.permute.xlu0 %1427
          %v1430 = vlaneseq
          %v1431 = vshrl.u32 %v1430, 7
          %v1432 = vsub.s32 0, %v1431
          %v1433 = vrot.slane %v1428, %v1432
          %1435 = vset.pattern.permute.xlu0 0
          %1436 = vperm.xlu0 %1435, %v1378
          %v1437 = vpop.permute.xlu0 %1436
          %v1439 = vlaneseq
          %v1440 = vshrl.u32 %v1439, 7
          %v1441 = vsub.s32 0, %v1440
          %v1442 = vrot.slane %v1437, %v1441
          %1444 = vset.pattern.permute.xlu0 0
          %1445 = vperm.xlu0 %1444, %v1379
          %v1446 = vpop.permute.xlu0 %1445
          %v1448 = vlaneseq
          %v1449 = vshrl.u32 %v1448, 7
          %v1450 = vsub.s32 0, %v1449
          %v1451 = vrot.slane %v1446, %v1450
          %1453 = vset.pattern.permute.xlu0 0
          %1454 = vperm.xlu0 %1453, %v1380
          %v1455 = vpop.permute.xlu0 %1454
          %v1457 = vlaneseq
          %v1458 = vshrl.u32 %v1457, 7
          %v1459 = vsub.s32 0, %v1458
          %v1460 = vrot.slane %v1455, %v1459
          %v1461 = vmul.f32 %v1381, %v1397
          %v1462 = vmul.f32 %v1382, %v1406
          %v1463 = vmul.f32 %v1383, %v1415
          %v1464 = vmul.f32 %v1384, %v1424
          %v1465 = vmul.f32 %v1385, %v1433
          %v1466 = vmul.f32 %v1386, %v1442
          %v1467 = vmul.f32 %v1387, %v1451
          %v1468 = vmul.f32 %v1388, %v1460
          %v1469 = vpack.c.bf16 %v1461, %v1461
          %v1470 = vpack.c.bf16 %v1462, %v1462
          %v1471 = vpack.c.bf16 %v1463, %v1463
          %v1472 = vpack.c.bf16 %v1464, %v1464
          %v1473 = vpack.c.bf16 %v1465, %v1465
          %v1474 = vpack.c.bf16 %v1466, %v1466
          %v1475 = vpack.c.bf16 %v1467, %v1467
          %v1476 = vpack.c.bf16 %v1468, %v1468
          %v1477 = vld [vmem:[%s2] sm:$0xf]
          %v1478 = vld [vmem:[%s2 + $0x4] sm:$0xf]
          %v1479 = vld [vmem:[%s2 + $0x8] sm:$0xf]
          %v1480 = vld [vmem:[%s2 + $0xc] sm:$0xf]
          %v1481 = vld [vmem:[%s2 + $0x10] sm:$0xf]
          %v1482 = vld [vmem:[%s2 + $0x14] sm:$0xf]
          %v1483 = vld [vmem:[%s2 + $0x18] sm:$0xf]
          %v1484 = vld [vmem:[%s2 + $0x1c] sm:$0xf]
          %v1485 = vld [vmem:[%s2 + $0x20] sm:$0xf]
          %v1486 = vld [vmem:[%s2 + $0x24] sm:$0xf]
          %v1487 = vld [vmem:[%s2 + $0x28] sm:$0xf]
          %v1488 = vld [vmem:[%s2 + $0x2c] sm:$0xf]
          %v1489 = vld [vmem:[%s2 + $0x30] sm:$0xf]
          %v1490 = vld [vmem:[%s2 + $0x34] sm:$0xf]
          %v1491 = vld [vmem:[%s2 + $0x38] sm:$0xf]
          %v1492 = vld [vmem:[%s2 + $0x3c] sm:$0xf]
          %v1493 = vld [vmem:[%s3] sm:$0x1]
          %v1495 = vlaneseq
          %v1496 = vshrl.u32 %v1495, 7
          %v1497 = vsub.s32 0, %v1496
          %v1498 = vrot.slane %v1493, %v1497
          %v1508 = vunpack.c.l.b16 %v1469
          %v1509 = vunpack.c.l.b16 %v1470
          %v1510 = vunpack.c.l.b16 %v1471
          %v1511 = vunpack.c.l.b16 %v1472
          %v1512 = vunpack.c.l.b16 %v1473
          %v1513 = vunpack.c.l.b16 %v1474
          %v1514 = vunpack.c.l.b16 %v1475
          %v1515 = vunpack.c.l.b16 %v1476
          %v1516 = vrot.slane %v1509, 7
          %vm1517 = vcmask 1041409
          %v1518 = vsel %vm1517, %v1516, %v1508
          %v1519 = vrot.slane %v1510, 6
          %vm1520 = vcmask 1042434
          %v1521 = vsel %vm1520, %v1519, %v1518
          %v1522 = vrot.slane %v1511, 5
          %vm1523 = vcmask 1043459
          %v1524 = vsel %vm1523, %v1522, %v1521
          %v1525 = vrot.slane %v1512, 4
          %vm1526 = vcmask 1044484
          %v1527 = vsel %vm1526, %v1525, %v1524
          %v1528 = vrot.slane %v1513, 3
          %vm1529 = vcmask 1045509
          %v1530 = vsel %vm1529, %v1528, %v1527
          %v1531 = vrot.slane %v1514, 2
          %vm1532 = vcmask 1046534
          %v1533 = vsel %vm1532, %v1531, %v1530
          %v1534 = vrot.slane %v1515, 1
          %vm1535 = vcmask 1047559
          %v1536 = vsel %vm1535, %v1534, %v1533
          %v1537 = vpack.c.b16 %v1536, %v1536
          %v1555 = vunpack.c.l.b16 %v1477
          %v1556 = vunpack.c.l.b16 %v1478
          %v1557 = vunpack.c.l.b16 %v1479
          %v1558 = vunpack.c.l.b16 %v1480
          %v1559 = vunpack.c.l.b16 %v1481
          %v1560 = vunpack.c.l.b16 %v1482
          %v1561 = vunpack.c.l.b16 %v1483
          %v1562 = vunpack.c.l.b16 %v1484
          %v1563 = vunpack.c.l.b16 %v1485
          %v1564 = vunpack.c.l.b16 %v1486
          %v1565 = vunpack.c.l.b16 %v1487
          %v1566 = vunpack.c.l.b16 %v1488
          %v1567 = vunpack.c.l.b16 %v1489
          %v1568 = vunpack.c.l.b16 %v1490
          %v1569 = vunpack.c.l.b16 %v1491
          %v1570 = vunpack.c.l.b16 %v1492
          %v1571 = vpack.c.b16 %v1556, %v1555
          %v1572 = vpack.c.b16 %v1558, %v1557
          %v1573 = vpack.c.b16 %v1560, %v1559
          %v1574 = vpack.c.b16 %v1562, %v1561
          %v1575 = vpack.c.b16 %v1564, %v1563
          %v1576 = vpack.c.b16 %v1566, %v1565
          %v1577 = vpack.c.b16 %v1568, %v1567
          %v1578 = vpack.c.b16 %v1570, %v1569
          %1587 = vmatprep.subr.bf16.mxu0 0
          %1588 = vmatpush1.bf16.msra.mxu0 %v1571
          %1589 = vmatprep.subr.bf16.mxu0 0
          %1590 = vmatpush1.bf16.msra.mxu0 %v1572
          %1591 = vmatprep.subr.bf16.mxu0 0
          %1592 = vmatpush1.bf16.msra.mxu0 %v1573
          %1593 = vmatprep.subr.bf16.mxu0 0
          %1594 = vmatpush1.bf16.msra.mxu0 %v1574
          %1595 = vmatprep.subr.bf16.mxu0 0
          %1596 = vmatpush1.bf16.msra.mxu0 %v1575
          %1597 = vmatprep.subr.bf16.mxu0 0
          %1598 = vmatpush1.bf16.msra.mxu0 %v1576
          %1599 = vmatprep.subr.bf16.mxu0 0
          %1600 = vmatpush1.bf16.msra.mxu0 %v1577
          %1601 = vmatprep.subr.bf16.mxu0 0
          %1602 = vmatpush1.bf16.msra.mxu0 %v1578
          %1603 = vmatprep.subr.bf16.mxu0 0
          %1604 = vmatpush1.bf16.msra.mxu0 0
          %1605 = vmatprep.subr.bf16.mxu0 0
          %1606 = vmatpush1.bf16.msra.mxu0 0
          %1607 = vmatprep.subr.bf16.mxu0 0
          %1608 = vmatpush1.bf16.msra.mxu0 0
          %1609 = vmatprep.subr.bf16.mxu0 0
          %1610 = vmatpush1.bf16.msra.mxu0 0
          %1611 = vmatprep.subr.bf16.mxu0 0
          %1612 = vmatpush1.bf16.msra.mxu0 0
          %1613 = vmatprep.subr.bf16.mxu0 0
          %1614 = vmatpush1.bf16.msra.mxu0 0
          %1615 = vmatprep.subr.bf16.mxu0 0
          %1616 = vmatpush1.bf16.msra.mxu0 0
          %1617 = vmatprep.subr.bf16.mxu0 0
          %1618 = vmatpush1.bf16.msra.mxu0 0
          %1619 = vmatprep.mubr.bf16.mxu0 0
          %1620 = vmatmul.mubr.bf16.gmra.mrb[0].mxu0 %v1537
          %v1621 = vpop.f32.mrb[0].mxu0
          %v1622 = vadd.f32 %v1498, %v1621
          %v1623 = vpop.f32.mrb[0].mxu0
          %v1624 = vpop.f32.mrb[0].mxu0
          %v1625 = vpop.f32.mrb[0].mxu0
          %1626 = vdwg.mxu0
          %v1627 = vmax.f32 %v1622, 0.0
          %v1628 = vld [vmem:[%s4] sm:$0x1]
          %v1630 = vlaneseq
          %v1631 = vshrl.u32 %v1630, 7
          %v1632 = vsub.s32 0, %v1631
          %v1633 = vrot.slane %v1628, %v1632
          %v1635 = vmul.f32 %v1627, %v1633
          %vm1636 = vcmask 523264
          %v1637 = vsel %vm1636, %v1635, 0.0
          %1638 = vadd.xlane.f32.xlu0 %v1637
          %v1639 = vpop.xlane.xlu0 %1638
          %s1640 = sld [smem:[#allocation4]]
          %v1641 = vstv %s1640
          %v1642 = vadd.f32 %v1639, %v1641
          %vm1643 = vcmask 7168
          %1644 = vst.msk [vmem:[%s408] sm:$0xff] %vm1643, %v1642
        $region97: #{tpu_custom_call.1} parent=80 // pred_fallthru
          _
        %p1645 = scmp.lt.s32.totalorder %s25, 1
        %s1646 = scalar_select %p1645, %s25, 1
        %s1647 = smul.addr %s1646, 8
        %s1648 = scalar_lea.vmem %s6, %s1647
        // Predicated region
        $region98: #{tpu_custom_call.1} parent=80 // pred_check
          %p1649 = pneg %p191
        $region99: #{tpu_custom_call.1} parent=80 // pred_check_branch
          %1651 = sbr.rel (%p1649) target = $region101
        $region100: #{tpu_custom_call.1} parent=80 // pred_region
          _
        $region101: #{tpu_custom_call.1} parent=80 // pred_fallthru
          _
      $region81: #{tpu_custom_call.1} parent=5 // pred_fallthru
        _
      %p1652 = scmp.le.s32.totalorder 2, %s16
      // Predicated region
      $region102: #{tpu_custom_call.1} parent=5 // pred_check
        %p1653 = pneg %p1652
      $region103: #{tpu_custom_call.1} parent=5 // pred_check_branch
        %1655 = sbr.rel (%p1653) target = $region105
      $region104: #{tpu_custom_call.1} parent=5 // pred_region
        %s1656 = ssub.s32 %s16, 2
        // Predicated region
        $region106: #{tpu_custom_call.1} parent=104 // pred_check
          %p1657 = pneg %p197
        $region107: #{tpu_custom_call.1} parent=104 // pred_check_branch
          %1659 = sbr.rel (%p1657) target = $region109
        $region108: #{tpu_custom_call.1} parent=104 // pred_region
          %p1660 = scmp.lt.s32.totalorder %s27, 1
          %s1661 = scalar_select %p1660, %s27, 1
          %s1662 = smul.addr %s1661, 8
          %s1663 = scalar_lea.vmem %s6, %s1662
        $region109: #{tpu_custom_call.1} parent=104 // pred_fallthru
          _
      $region105: #{tpu_custom_call.1} parent=5 // pred_fallthru
        _
    $region6: #{tpu_custom_call.1} parent=1 // loop_footer
      %s20 = sadd.s32 1, %s16
    $region7: #{tpu_custom_call.1} parent=1 // loop_footer_branch
      %15 = sbr.rel target = $region3
    $region8: #{tpu_custom_call.1} parent=1 // loop_exit
      _
    %1664 = vsyncpa [#allocation6], 1
    %s1665 = scalar_lea.sflag [#allocation6], 1
    %1666 = vsyncpa %s1665, 1

</llo_original>
